<compile_context>
chip_gen: v7x
topology: tpu7x:2x2x1
jax: 0.10.0
libtpu: 0.0.40
codegen_flags: <defaults>
</compile_context>

<pallas_src>
import jax
import jax.numpy as jnp
from jax.experimental import pallas as pl
from jax.experimental.pallas import tpu as pltpu


def _target_attention_kernel(tkey_ref, ikeys_ref, ivals_ref, mask_ref,
                             wbig_ref, segk_ref, repv_ref, wvfold_ref, out_ref):
    f32 = jnp.float32
    # Streamed operands arrive in the producer's dtype; cast in-register (cheap VPU op).
    tkey = tkey_ref[...].astype(f32)          # (bb, Dk)
    ikeys = ikeys_ref[...].astype(f32)        # (bb, L*Dk)  lane-dense
    ivals = ivals_ref[...].astype(f32)        # (bb, L*Dv)  lane-dense
    mask = mask_ref[...].astype(f32)          # (bb, L)

    # q replicated over the L key segments: q_rep[b, l*Dk+d] = (tkey @ (Wt Wk^T / s))[b, d]
    q_rep = jnp.dot(tkey, wbig_ref[...], preferred_element_type=f32)       # (bb, L*Dk)

    # scores[b, l] = sum_d q[b,d] * item_keys[b,l,d]:
    # one VPU multiply + one segment-sum matmul against a constant 0/1 matrix.
    prod = q_rep * ikeys                                                    # VPU
    scores = jnp.dot(prod, segk_ref[...], preferred_element_type=f32)       # (bb, L)
    scores = scores + (-100000000.0) * (1.0 - mask)                         # exact module bias

    # Numerically stable softmax over L, f32 math on every generation.
    m = jnp.max(scores, axis=-1, keepdims=True)
    p = jnp.exp(scores - m)
    denom = jnp.sum(p, axis=-1, keepdims=True)
    attn = p * pl.reciprocal(denom, approx=True)                            # EUP vrcp slot

    # Context + value projection: replicate attn over the Dv segments (0/1 matmul),
    # one VPU multiply, then a single (bb, L*Dv) x (L*Dv, Dv) matmul with tile(Wv).
    attn_rep = jnp.dot(attn, repv_ref[...], preferred_element_type=f32)     # (bb, L*Dv)
    wprod = attn_rep * ivals                                                # VPU
    out = jnp.dot(wprod, wvfold_ref[...], preferred_element_type=f32)       # (bb, Dv)
    out_ref[...] = out.astype(out_ref.dtype)


def _vmem_capacity_bytes():
    try:
        return int(pltpu.get_tpu_info().vmem_capacity_bytes)
    except Exception:
        return 64 * 1024 * 1024        # conservative fallback (v7x per-TensorCore VMEM)


def _pad_to(n, m):
    return ((int(n) + m - 1) // m) * m


def target_attention(target_key, item_keys, item_values, mask, wt, wk, wv,
                     *, batch_block=None, vmem_fraction=0.6):
    B, Dk = target_key.shape
    _, L, _ = item_keys.shape
    Dv = item_values.shape[-1]
    flat_k, flat_v = L * Dk, L * Dv
    scaler = float(Dk) ** 0.5
    f32 = jnp.float32

    # ---- One-time algebraic folds (tiny constants only, outside the hot loop) ----
    w_qk = (wt.astype(f32) @ wk.astype(f32).T) / scaler                     # (Dk, Dk)
    w_big = jnp.tile(w_qk, (1, L))                                          # (Dk, L*Dk)
    seg_k = jnp.kron(jnp.eye(L, dtype=f32), jnp.ones((Dk, 1), f32))         # (L*Dk, L)  0/1
    rep_v = jnp.kron(jnp.eye(L, dtype=f32), jnp.ones((1, Dv), f32))         # (L, L*Dv)  0/1
    wv_fold = jnp.tile(wv.astype(f32), (L, 1))                              # (L*Dv, Dv)

    # ---- Lane-dense streaming layout: free relabel of contiguous data, no cast/pad ----
    ikeys_flat = item_keys.reshape(B, flat_k)
    ivals_flat = item_values.reshape(B, flat_v)

    # ---- Tile selection: (8,128)-padding-aware VMEM accounting, generation aware ----
    cap = _vmem_capacity_bytes()
    budget = int(cap * vmem_fraction)                    # headroom below physical VMEM
    row_bytes = 2 * (_pad_to(flat_k, 128) * ikeys_flat.dtype.itemsize       # double-buffered
                     + _pad_to(flat_v, 128) * ivals_flat.dtype.itemsize
                     + _pad_to(Dk, 128) * target_key.dtype.itemsize
                     + _pad_to(L, 128) * mask.dtype.itemsize
                     + _pad_to(Dv, 128) * 4)                                # f32 output block
    row_bytes += 4 * _pad_to(max(flat_k, flat_v), 128) * 4                  # live f32 temps
    if batch_block is None:
        bb = max(8, (budget // row_bytes) // 8 * 8)
        if B >= 16:
            # keep >= 2 grid steps so v7x can shard the batch over its 2 TensorCores
            bb = min(bb, max(8, (B // 2) // 8 * 8))
        batch_block = bb
    batch_block = int(batch_block)
    if batch_block >= B:
        batch_block = B                  # one full-batch block (always a legal block shape)
    else:
        batch_block = max(8, batch_block // 8 * 8)
    grid_b = int(pl.cdiv(B, batch_block))
    # NOTE: if B is not a multiple of batch_block, the ragged last block is handled by
    # Pallas block masking (rows are fully independent; masked rows never write back),
    # instead of paying a full jnp.pad pass over the streamed tensors.

    const_bytes = 2 * 4 * (_pad_to(Dk, 8) * _pad_to(flat_k, 128)
                           + _pad_to(flat_k, 8) * _pad_to(L, 128)
                           + _pad_to(L, 8) * _pad_to(flat_v, 128)
                           + _pad_to(flat_v, 8) * _pad_to(Dv, 128))
    need = batch_block * row_bytes + const_bytes + (2 << 20)
    vmem_limit = int(min(int(cap * 0.9), max(16 << 20, need)))

    out = pl.pallas_call(
        _target_attention_kernel,
        out_shape=jax.ShapeDtypeStruct((B, Dv), f32),
        grid_spec=pltpu.PrefetchScalarGridSpec(
            num_scalar_prefetch=0,
            grid=(grid_b,),
            in_specs=[
                pl.BlockSpec((batch_block, Dk), lambda b: (b, 0)),
                pl.BlockSpec((batch_block, flat_k), lambda b: (b, 0)),
                pl.BlockSpec((batch_block, flat_v), lambda b: (b, 0)),
                pl.BlockSpec((batch_block, L), lambda b: (b, 0)),
                pl.BlockSpec((Dk, flat_k), lambda b: (0, 0)),
                pl.BlockSpec((flat_k, L), lambda b: (0, 0)),
                pl.BlockSpec((L, flat_v), lambda b: (0, 0)),
                pl.BlockSpec((flat_v, Dv), lambda b: (0, 0)),
            ],
            # TODO(synk): output block is lane-sparse (Dv=32 of 128 lanes) -> masked vst;
            # it is ~1% of the streamed bytes here so a packed output layout is skipped.
            out_specs=pl.BlockSpec((batch_block, Dv), lambda b: (b, 0)),
        ),
        compiler_params=pltpu.CompilerParams(
            dimension_semantics=("parallel",),
            vmem_limit_bytes=vmem_limit),
    )(target_key, ikeys_flat, ivals_flat, mask,
      w_big, seg_k, rep_v, wv_fold)

    return out


def target_attention_ref(target_key, item_keys, item_values, mask, wt, wk, wv):
    # Pure-JAX reference mirroring the PyTorch forward.
    Dk = target_key.shape[-1]
    scaler = float(Dk) ** 0.5
    tq = (target_key @ wt)[:, None, :]
    ik = item_keys @ wk
    iv = item_values @ wv
    aw = jnp.sum(tq * ik, axis=-1, keepdims=True) / scaler
    aw = aw + (-100000000.0) * (1.0 - mask[:, :, None])
    aw = jax.nn.softmax(aw, axis=1)
    return jnp.sum(aw * iv, axis=1)


if __name__ == "__main__":
    B, L, Dk, Dv = 64, 16, 32, 32

    key = jax.random.PRNGKey(0)
    k1, k2, k3, k4, k5, k6, k7 = jax.random.split(key, 7)

    target_key = jax.random.normal(k1, (B, Dk), dtype=jnp.float32)
    item_keys = jax.random.normal(k2, (B, L, Dk), dtype=jnp.float32)
    item_values = jax.random.normal(k3, (B, L, Dv), dtype=jnp.float32)
    # Binary mask, guarantee at least one valid position per row.
    mask = (jax.random.uniform(k4, (B, L)) > 0.3).astype(jnp.float32)
    mask = mask.at[:, 0].set(1.0)

    # Deterministic bias-free Linear weights, (in, out) layout.
    wt = jax.random.normal(k5, (Dk, Dk), dtype=jnp.float32) * (Dk ** -0.5)
    wk = jax.random.normal(k6, (Dk, Dk), dtype=jnp.float32) * (Dk ** -0.5)
    wv = jax.random.normal(k7, (Dv, Dv), dtype=jnp.float32) * (Dv ** -0.5)

    ref = target_attention_ref(target_key, item_keys, item_values, mask, wt, wk, wv)

    # f32 producer: streamed as-is (no wrapper cast/pad passes), f32 math throughout.
    out_f32 = jax.block_until_ready(
        target_attention(target_key, item_keys, item_values, mask, wt, wk, wv))
    assert out_f32.shape == (B, Dv)
    assert jnp.allclose(out_f32, ref, atol=5e-3, rtol=5e-3), "f32 kernel mismatch vs reference"

    # bf16 producer: kernel streams bf16 (half the HBM bytes); softmax/accum stay f32.
    out_bf16 = jax.block_until_ready(
        target_attention(target_key.astype(jnp.bfloat16),
                         item_keys.astype(jnp.bfloat16),
                         item_values.astype(jnp.bfloat16),
                         mask, wt, wk, wv))
    assert out_bf16.shape == (B, Dv)
    assert jnp.allclose(out_bf16, ref, atol=3e-2, rtol=3e-2), "bf16 kernel mismatch vs reference"

    print("KERNEL_OK")
</pallas_src>

<mosaic_0001>
module attributes {stable_mosaic.version = 11 : i64} {
  func.func @_target_attention_kernel(%arg0: i32, %arg1: memref<32x32xf32, #tpu.memory_space<vmem>>, %arg2: memref<32x512xf32, #tpu.memory_space<vmem>>, %arg3: memref<32x512xf32, #tpu.memory_space<vmem>>, %arg4: memref<32x16xf32, #tpu.memory_space<vmem>>, %arg5: memref<32x512xf32, #tpu.memory_space<vmem>>, %arg6: memref<512x16xf32, #tpu.memory_space<vmem>>, %arg7: memref<16x512xf32, #tpu.memory_space<vmem>>, %arg8: memref<512x32xf32, #tpu.memory_space<vmem>>, %arg9: memref<32x32xf32, #tpu.memory_space<vmem>>) attributes {dimension_semantics = [#tpu.dimension_semantics<parallel>], iteration_bounds = array<i64: 2>, scalar_prefetch = 0 : i64, scratch_operands = 0 : i64, tpu.core_type = #tpu.core_type<tc>, window_params = [{transform_indices = @transform_0, window_bounds = array<i64: 32, 32>}, {transform_indices = @transform_1, window_bounds = array<i64: 32, 512>}, {transform_indices = @transform_2, window_bounds = array<i64: 32, 512>}, {transform_indices = @transform_3, window_bounds = array<i64: 32, 16>}, {pipeline_mode = #tpu.pipeline_mode<synchronous>, transform_indices = @transform_4, window_bounds = array<i64: 32, 512>}, {pipeline_mode = #tpu.pipeline_mode<synchronous>, transform_indices = @transform_5, window_bounds = array<i64: 512, 16>}, {pipeline_mode = #tpu.pipeline_mode<synchronous>, transform_indices = @transform_6, window_bounds = array<i64: 16, 512>}, {pipeline_mode = #tpu.pipeline_mode<synchronous>, transform_indices = @transform_7, window_bounds = array<i64: 512, 32>}, {transform_indices = @transform_8, window_bounds = array<i64: 32, 32>}]} {
    %c0 = arith.constant 0 : index
    %c0_0 = arith.constant 0 : index
    %0 = vector.load %arg1[%c0, %c0_0] : memref<32x32xf32, #tpu.memory_space<vmem>>, vector<32x32xf32>
    %c0_1 = arith.constant 0 : index
    %c0_2 = arith.constant 0 : index
    %1 = vector.load %arg2[%c0_1, %c0_2] : memref<32x512xf32, #tpu.memory_space<vmem>>, vector<32x512xf32>
    %c0_3 = arith.constant 0 : index
    %c0_4 = arith.constant 0 : index
    %2 = vector.load %arg3[%c0_3, %c0_4] : memref<32x512xf32, #tpu.memory_space<vmem>>, vector<32x512xf32>
    %c0_5 = arith.constant 0 : index
    %c0_6 = arith.constant 0 : index
    %3 = vector.load %arg4[%c0_5, %c0_6] : memref<32x16xf32, #tpu.memory_space<vmem>>, vector<32x16xf32>
    %c0_7 = arith.constant 0 : index
    %c0_8 = arith.constant 0 : index
    %4 = vector.load %arg5[%c0_7, %c0_8] : memref<32x512xf32, #tpu.memory_space<vmem>>, vector<32x512xf32>
    %cst = arith.constant dense<0.000000e+00> : vector<32x512xf32>
    %5 = tpu.matmul %0, %4, %cst {dimension_numbers = #tpu.dot_dimension_numbers<[1], [0], [0], [1], [0, 0, 1, 1], [], []>} : vector<32x32xf32>, vector<32x512xf32>, vector<32x512xf32> -> vector<32x512xf32>
    %6 = arith.mulf %5, %1 : vector<32x512xf32>
    %c0_9 = arith.constant 0 : index
    %c0_10 = arith.constant 0 : index
    %7 = vector.load %arg6[%c0_9, %c0_10] : memref<512x16xf32, #tpu.memory_space<vmem>>, vector<512x16xf32>
    %cst_11 = arith.constant dense<0.000000e+00> : vector<32x16xf32>
    %8 = tpu.matmul %6, %7, %cst_11 {dimension_numbers = #tpu.dot_dimension_numbers<[1], [0], [0], [1], [0, 0, 1, 1], [], []>} : vector<32x512xf32>, vector<512x16xf32>, vector<32x16xf32> -> vector<32x16xf32>
    %cst_12 = arith.constant 1.000000e+00 : f32
    %9 = vector.broadcast %cst_12 : f32 to vector<32x16xf32>
    %10 = arith.subf %9, %3 : vector<32x16xf32>
    %cst_13 = arith.constant -1.000000e+08 : f32
    %11 = vector.broadcast %cst_13 : f32 to vector<32x16xf32>
    %12 = arith.mulf %11, %10 : vector<32x16xf32>
    %13 = arith.addf %8, %12 : vector<32x16xf32>
    %cst_14 = arith.constant dense<0xFF800000> : vector<32xf32>
    %14 = vector.multi_reduction <maximumf>, %13, %cst_14 [1] : vector<32x16xf32> to vector<32xf32>
    %15 = vector.shape_cast %14 : vector<32xf32> to vector<32x1xf32>
    %16 = vector.broadcast %15 : vector<32x1xf32> to vector<32x16xf32>
    %17 = arith.subf %13, %16 : vector<32x16xf32>
    %18 = math.exp %17 : vector<32x16xf32>
    %cst_15 = arith.constant dense<0.000000e+00> : vector<32xf32>
    %19 = vector.multi_reduction <add>, %18, %cst_15 [1] : vector<32x16xf32> to vector<32xf32>
    %20 = vector.shape_cast %19 : vector<32xf32> to vector<32x1xf32>
    %21 = tpu.reciprocal %20 {approx = true} : vector<32x1xf32> -> vector<32x1xf32>
    %22 = vector.broadcast %21 : vector<32x1xf32> to vector<32x16xf32>
    %23 = arith.mulf %18, %22 : vector<32x16xf32>
    %c0_16 = arith.constant 0 : index
    %c0_17 = arith.constant 0 : index
    %24 = vector.load %arg7[%c0_16, %c0_17] : memref<16x512xf32, #tpu.memory_space<vmem>>, vector<16x512xf32>
    %cst_18 = arith.constant dense<0.000000e+00> : vector<32x512xf32>
    %25 = tpu.matmul %23, %24, %cst_18 {dimension_numbers = #tpu.dot_dimension_numbers<[1], [0], [0], [1], [0, 0, 1, 1], [], []>} : vector<32x16xf32>, vector<16x512xf32>, vector<32x512xf32> -> vector<32x512xf32>
    %26 = arith.mulf %25, %2 : vector<32x512xf32>
    %c0_19 = arith.constant 0 : index
    %c0_20 = arith.constant 0 : index
    %27 = vector.load %arg8[%c0_19, %c0_20] : memref<512x32xf32, #tpu.memory_space<vmem>>, vector<512x32xf32>
    %cst_21 = arith.constant dense<0.000000e+00> : vector<32x32xf32>
    %28 = tpu.matmul %26, %27, %cst_21 {dimension_numbers = #tpu.dot_dimension_numbers<[1], [0], [0], [1], [0, 0, 1, 1], [], []>} : vector<32x512xf32>, vector<512x32xf32>, vector<32x32xf32> -> vector<32x32xf32>
    %c0_22 = arith.constant 0 : index
    %c0_23 = arith.constant 0 : index
    %29 = vector.load %arg9[%c0_22, %c0_23] : memref<32x32xf32, #tpu.memory_space<vmem>>, vector<32x32xf32>
    tpu.vector_store %arg9[%c0_22, %c0_23], %28 {strides = array<i32>} : memref<32x32xf32, #tpu.memory_space<vmem>>, vector<32x32xf32>,
    return
  }
  func.func @transform_0(%arg0: i32) -> (i32, i32) {
    %c0_i32 = arith.constant 0 : i32
    %c0_i32_0 = arith.constant 0 : i32
    return %arg0, %c0_i32 : i32, i32
  }
  func.func @transform_1(%arg0: i32) -> (i32, i32) {
    %c0_i32 = arith.constant 0 : i32
    %c0_i32_0 = arith.constant 0 : i32
    return %arg0, %c0_i32 : i32, i32
  }
  func.func @transform_2(%arg0: i32) -> (i32, i32) {
    %c0_i32 = arith.constant 0 : i32
    %c0_i32_0 = arith.constant 0 : i32
    return %arg0, %c0_i32 : i32, i32
  }
  func.func @transform_3(%arg0: i32) -> (i32, i32) {
    %c0_i32 = arith.constant 0 : i32
    %c0_i32_0 = arith.constant 0 : i32
    return %arg0, %c0_i32 : i32, i32
  }
  func.func @transform_4(%arg0: i32) -> (i32, i32) {
    %c0_i32 = arith.constant 0 : i32
    %c0_i32_0 = arith.constant 0 : i32
    %c0_i32_1 = arith.constant 0 : i32
    return %c0_i32, %c0_i32_0 : i32, i32
  }
  func.func @transform_5(%arg0: i32) -> (i32, i32) {
    %c0_i32 = arith.constant 0 : i32
    %c0_i32_0 = arith.constant 0 : i32
    %c0_i32_1 = arith.constant 0 : i32
    return %c0_i32, %c0_i32_0 : i32, i32
  }
  func.func @transform_6(%arg0: i32) -> (i32, i32) {
    %c0_i32 = arith.constant 0 : i32
    %c0_i32_0 = arith.constant 0 : i32
    %c0_i32_1 = arith.constant 0 : i32
    return %c0_i32, %c0_i32_0 : i32, i32
  }
  func.func @transform_7(%arg0: i32) -> (i32, i32) {
    %c0_i32 = arith.constant 0 : i32
    %c0_i32_0 = arith.constant 0 : i32
    %c0_i32_1 = arith.constant 0 : i32
    return %c0_i32, %c0_i32_0 : i32, i32
  }
  func.func @transform_8(%arg0: i32) -> (i32, i32) {
    %c0_i32 = arith.constant 0 : i32
    %c0_i32_0 = arith.constant 0 : i32
    return %arg0, %c0_i32 : i32, i32
  }
}

</mosaic_0001>

<llo_original>
// kernel: tpu_custom_call.1
$region0: #{tpu_custom_call.1}
  #allocation0 [shape = 'u32[]', space=smem, size = 0x4, offset = 0x4, fixed_abs, tag = 'smem constant byte address 0x4 - core index']
  #allocation1 [shape = 'u32[144,128]{1,0:T(1,128)}', space=vmem, size = 0x12000, scoped, tag = 'internal scratch']
  %s0 = inlined_call_operand.vmem [shape: f32[64,32], index: 0, kind: input, shape index: {}]
  %s1 = inlined_call_operand.vmem [shape: f32[64,512], index: 1, kind: input, shape index: {}]
  %s2 = inlined_call_operand.vmem [shape: f32[64,512], index: 2, kind: input, shape index: {}]
  %s3 = inlined_call_operand.vmem [shape: f32[64,16], index: 3, kind: input, shape index: {}]
  %s4 = inlined_call_operand.vmem [shape: f32[32,512], index: 4, kind: input, shape index: {}]
  %s5 = inlined_call_operand.vmem [shape: f32[512,16], index: 5, kind: input, shape index: {}]
  %s6 = inlined_call_operand.vmem [shape: f32[16,512], index: 6, kind: input, shape index: {}]
  %s7 = inlined_call_operand.vmem [shape: f32[512,32], index: 7, kind: input, shape index: {}]
  %s8 = inlined_call_operand.vmem [shape: f32[64,32], index: 8, kind: output, shape index: {}]
  %s9 = sld [smem:[#allocation0]]
  $region65: #{tpu_custom_call.1} parent=0
    _
  %s11 = ssub.s32 1, %s9
  %s12 = scalar_select 0, %s11, %s9
  loop: start=0, step=1, limit=4
  $region2: #{tpu_custom_call.1} parent=0 // loop_pre_header
    _
  $region3: #{tpu_custom_call.1} parent=0 // loop_header
    %s14 = sphi 0, %s18
    %p15 = scmp.ge.s32.totalorder %s14, 4
    %s24 = sphi 0, %s26
    %s27 = sphi 0, %s24
    %s28 = sphi 0, %s27
    %s44 = sphi 0, %s28
    %s50 = sphi 0, %s52
    %s53 = sphi 0, %s50
    %s54 = sphi 0, %s53
    %s70 = sphi 0, %s54
    %s76 = sphi 0, %s78
    %s79 = sphi 0, %s76
    %s80 = sphi 0, %s79
    %s96 = sphi 0, %s80
    %s102 = sphi 0, %s104
    %s105 = sphi 0, %s102
    %s106 = sphi 0, %s105
    %s122 = sphi 0, %s106
    %s126 = sphi 0, %s126
    %s128 = sphi 0, %s126
    %s129 = sphi 0, %s128
    %s143 = sphi 0, %s129
    %s147 = sphi 0, %s147
    %s149 = sphi 0, %s147
    %s150 = sphi 0, %s149
    %s164 = sphi 0, %s150
    %s168 = sphi 0, %s168
    %s170 = sphi 0, %s168
    %s171 = sphi 0, %s170
    %s185 = sphi 0, %s171
    %s189 = sphi 0, %s189
    %s191 = sphi 0, %s189
    %s192 = sphi 0, %s191
    %s206 = sphi 0, %s192
    %s212 = sphi 0, %s214
    %s215 = sphi 0, %s212
    %s216 = sphi 0, %s215
    %s232 = sphi 0, %s216
  $region4: #{tpu_custom_call.1} parent=0 // loop_header_branch
    %17 = sbr.rel (%p15) target = $region8
  $region5: #{tpu_custom_call.1} parent=0 // loop_body
    %s19 = ssub.s32 %s14, 1
    %s20 = ssub.s32 %s14, 2
    %s21 = sadd.s32 %s14, 1
    %s22 = ssub.s32 %s14, %s21
    %p23 = scmp.eq.s32.totalorder %s22, 0
    %s25 = sadd.s32 %s24, 1
    %s26 = scalar_select %p23, %s24, %s25
    %p29 = pneg %p23
    %p30 = scmp.eq.s32.totalorder %s14, 1
    %p31 = por %p29, %p30
    %p32 = scmp.ne.s32.totalorder %s24, %s27
    %p33 = scmp.eq.s32.totalorder %s14, 0
    %p34 = por %p32, %p33
    %p35 = scmp.ne.s32.totalorder %s24, %s27
    %p36 = scmp.eq.s32.totalorder %s19, 1
    %p37 = por %p35, %p36
    %p38 = scmp.ne.s32.totalorder %s27, %s28
    %p39 = scmp.eq.s32.totalorder %s19, 0
    %p40 = por %p38, %p39
    %p41 = scmp.ne.s32.totalorder %s27, %s28
    %p42 = scmp.eq.s32.totalorder %s20, 1
    %p43 = por %p41, %p42
    %p45 = scmp.ne.s32.totalorder %s28, %s44
    %p46 = scmp.eq.s32.totalorder %s20, 0
    %p47 = por %p45, %p46
    %s48 = ssub.s32 %s14, %s21
    %p49 = scmp.eq.s32.totalorder %s48, 0
    %s51 = sadd.s32 %s50, 1
    %s52 = scalar_select %p49, %s50, %s51
    %p55 = pneg %p49
    %p56 = scmp.eq.s32.totalorder %s14, 1
    %p57 = por %p55, %p56
    %p58 = scmp.ne.s32.totalorder %s50, %s53
    %p59 = scmp.eq.s32.totalorder %s14, 0
    %p60 = por %p58, %p59
    %p61 = scmp.ne.s32.totalorder %s50, %s53
    %p62 = scmp.eq.s32.totalorder %s19, 1
    %p63 = por %p61, %p62
    %p64 = scmp.ne.s32.totalorder %s53, %s54
    %p65 = scmp.eq.s32.totalorder %s19, 0
    %p66 = por %p64, %p65
    %p67 = scmp.ne.s32.totalorder %s53, %s54
    %p68 = scmp.eq.s32.totalorder %s20, 1
    %p69 = por %p67, %p68
    %p71 = scmp.ne.s32.totalorder %s54, %s70
    %p72 = scmp.eq.s32.totalorder %s20, 0
    %p73 = por %p71, %p72
    %s74 = ssub.s32 %s14, %s21
    %p75 = scmp.eq.s32.totalorder %s74, 0
    %s77 = sadd.s32 %s76, 1
    %s78 = scalar_select %p75, %s76, %s77
    %p81 = pneg %p75
    %p82 = scmp.eq.s32.totalorder %s14, 1
    %p83 = por %p81, %p82
    %p84 = scmp.ne.s32.totalorder %s76, %s79
    %p85 = scmp.eq.s32.totalorder %s14, 0
    %p86 = por %p84, %p85
    %p87 = scmp.ne.s32.totalorder %s76, %s79
    %p88 = scmp.eq.s32.totalorder %s19, 1
    %p89 = por %p87, %p88
    %p90 = scmp.ne.s32.totalorder %s79, %s80
    %p91 = scmp.eq.s32.totalorder %s19, 0
    %p92 = por %p90, %p91
    %p93 = scmp.ne.s32.totalorder %s79, %s80
    %p94 = scmp.eq.s32.totalorder %s20, 1
    %p95 = por %p93, %p94
    %p97 = scmp.ne.s32.totalorder %s80, %s96
    %p98 = scmp.eq.s32.totalorder %s20, 0
    %p99 = por %p97, %p98
    %s100 = ssub.s32 %s14, %s21
    %p101 = scmp.eq.s32.totalorder %s100, 0
    %s103 = sadd.s32 %s102, 1
    %s104 = scalar_select %p101, %s102, %s103
    %p107 = pneg %p101
    %p108 = scmp.eq.s32.totalorder %s14, 1
    %p109 = por %p107, %p108
    %p110 = scmp.ne.s32.totalorder %s102, %s105
    %p111 = scmp.eq.s32.totalorder %s14, 0
    %p112 = por %p110, %p111
    %p113 = scmp.ne.s32.totalorder %s102, %s105
    %p114 = scmp.eq.s32.totalorder %s19, 1
    %p115 = por %p113, %p114
    %p116 = scmp.ne.s32.totalorder %s105, %s106
    %p117 = scmp.eq.s32.totalorder %s19, 0
    %p118 = por %p116, %p117
    %p119 = scmp.ne.s32.totalorder %s105, %s106
    %p120 = scmp.eq.s32.totalorder %s20, 1
    %p121 = por %p119, %p120
    %p123 = scmp.ne.s32.totalorder %s106, %s122
    %p124 = scmp.eq.s32.totalorder %s20, 0
    %p125 = por %p123, %p124
    %s127 = sadd.s32 %s126, 1
    %p130 = scmp.eq.s32.totalorder %s14, 1
    %p131 = scmp.ne.s32.totalorder %s126, %s128
    %p132 = scmp.eq.s32.totalorder %s14, 0
    %p133 = por %p131, %p132
    %p134 = scmp.ne.s32.totalorder %s126, %s128
    %p135 = scmp.eq.s32.totalorder %s19, 1
    %p136 = por %p134, %p135
    %p137 = scmp.ne.s32.totalorder %s128, %s129
    %p138 = scmp.eq.s32.totalorder %s19, 0
    %p139 = por %p137, %p138
    %p140 = scmp.ne.s32.totalorder %s128, %s129
    %p141 = scmp.eq.s32.totalorder %s20, 1
    %p142 = por %p140, %p141
    %p144 = scmp.ne.s32.totalorder %s129, %s143
    %p145 = scmp.eq.s32.totalorder %s20, 0
    %p146 = por %p144, %p145
    %s148 = sadd.s32 %s147, 1
    %p151 = scmp.eq.s32.totalorder %s14, 1
    %p152 = scmp.ne.s32.totalorder %s147, %s149
    %p153 = scmp.eq.s32.totalorder %s14, 0
    %p154 = por %p152, %p153
    %p155 = scmp.ne.s32.totalorder %s147, %s149
    %p156 = scmp.eq.s32.totalorder %s19, 1
    %p157 = por %p155, %p156
    %p158 = scmp.ne.s32.totalorder %s149, %s150
    %p159 = scmp.eq.s32.totalorder %s19, 0
    %p160 = por %p158, %p159
    %p161 = scmp.ne.s32.totalorder %s149, %s150
    %p162 = scmp.eq.s32.totalorder %s20, 1
    %p163 = por %p161, %p162
    %p165 = scmp.ne.s32.totalorder %s150, %s164
    %p166 = scmp.eq.s32.totalorder %s20, 0
    %p167 = por %p165, %p166
    %s169 = sadd.s32 %s168, 1
    %p172 = scmp.eq.s32.totalorder %s14, 1
    %p173 = scmp.ne.s32.totalorder %s168, %s170
    %p174 = scmp.eq.s32.totalorder %s14, 0
    %p175 = por %p173, %p174
    %p176 = scmp.ne.s32.totalorder %s168, %s170
    %p177 = scmp.eq.s32.totalorder %s19, 1
    %p178 = por %p176, %p177
    %p179 = scmp.ne.s32.totalorder %s170, %s171
    %p180 = scmp.eq.s32.totalorder %s19, 0
    %p181 = por %p179, %p180
    %p182 = scmp.ne.s32.totalorder %s170, %s171
    %p183 = scmp.eq.s32.totalorder %s20, 1
    %p184 = por %p182, %p183
    %p186 = scmp.ne.s32.totalorder %s171, %s185
    %p187 = scmp.eq.s32.totalorder %s20, 0
    %p188 = por %p186, %p187
    %s190 = sadd.s32 %s189, 1
    %p193 = scmp.eq.s32.totalorder %s14, 1
    %p194 = scmp.ne.s32.totalorder %s189, %s191
    %p195 = scmp.eq.s32.totalorder %s14, 0
    %p196 = por %p194, %p195
    %p197 = scmp.ne.s32.totalorder %s189, %s191
    %p198 = scmp.eq.s32.totalorder %s19, 1
    %p199 = por %p197, %p198
    %p200 = scmp.ne.s32.totalorder %s191, %s192
    %p201 = scmp.eq.s32.totalorder %s19, 0
    %p202 = por %p200, %p201
    %p203 = scmp.ne.s32.totalorder %s191, %s192
    %p204 = scmp.eq.s32.totalorder %s20, 1
    %p205 = por %p203, %p204
    %p207 = scmp.ne.s32.totalorder %s192, %s206
    %p208 = scmp.eq.s32.totalorder %s20, 0
    %p209 = por %p207, %p208
    %s210 = ssub.s32 %s14, %s21
    %p211 = scmp.eq.s32.totalorder %s210, 0
    %s213 = sadd.s32 %s212, 1
    %s214 = scalar_select %p211, %s212, %s213
    %p217 = pneg %p211
    %p218 = scmp.eq.s32.totalorder %s14, 1
    %p219 = por %p217, %p218
    %p220 = scmp.ne.s32.totalorder %s212, %s215
    %p221 = scmp.eq.s32.totalorder %s14, 0
    %p222 = por %p220, %p221
    %p223 = scmp.ne.s32.totalorder %s212, %s215
    %p224 = scmp.eq.s32.totalorder %s19, 1
    %p225 = por %p223, %p224
    %p226 = scmp.ne.s32.totalorder %s215, %s216
    %p227 = scmp.eq.s32.totalorder %s19, 0
    %p228 = por %p226, %p227
    %p229 = scmp.ne.s32.totalorder %s215, %s216
    %p230 = scmp.eq.s32.totalorder %s20, 1
    %p231 = por %p229, %p230
    %p233 = scmp.ne.s32.totalorder %s216, %s232
    %p234 = scmp.eq.s32.totalorder %s20, 0
    %p235 = por %p233, %p234
    %p236 = scmp.le.s32.totalorder 1, %s14
    %p237 = scmp.lt.s32.totalorder %s14, 3
    %p238 = pnand %p236, %p237
    %p239 = pneg %p238
    // Predicated region
    $region9: #{tpu_custom_call.1} parent=5 // pred_check
      _
    $region10: #{tpu_custom_call.1} parent=5 // pred_check_branch
      %241 = sbr.rel (%p238) target = $region12
    $region11: #{tpu_custom_call.1} parent=5 // pred_region
      %s242 = ssub.s32 %s14, 1
      // Predicated region
      $region13: #{tpu_custom_call.1} parent=11 // pred_check
        %p243 = pneg %p139
      $region14: #{tpu_custom_call.1} parent=11 // pred_check_branch
        %245 = sbr.rel (%p243) target = $region16
      $region15: #{tpu_custom_call.1} parent=11 // pred_region
        _
      $region16: #{tpu_custom_call.1} parent=11 // pred_fallthru
        _
      // Predicated region
      $region17: #{tpu_custom_call.1} parent=11 // pred_check
        %p246 = pneg %p160
      $region18: #{tpu_custom_call.1} parent=11 // pred_check_branch
        %248 = sbr.rel (%p246) target = $region20
      $region19: #{tpu_custom_call.1} parent=11 // pred_region
        _
      $region20: #{tpu_custom_call.1} parent=11 // pred_fallthru
        _
      // Predicated region
      $region21: #{tpu_custom_call.1} parent=11 // pred_check
        %p249 = pneg %p181
      $region22: #{tpu_custom_call.1} parent=11 // pred_check_branch
        %251 = sbr.rel (%p249) target = $region24
      $region23: #{tpu_custom_call.1} parent=11 // pred_region
        _
      $region24: #{tpu_custom_call.1} parent=11 // pred_fallthru
        _
      // Predicated region
      $region25: #{tpu_custom_call.1} parent=11 // pred_check
        %p252 = pneg %p202
      $region26: #{tpu_custom_call.1} parent=11 // pred_check_branch
        %254 = sbr.rel (%p252) target = $region28
      $region27: #{tpu_custom_call.1} parent=11 // pred_region
        _
      $region28: #{tpu_custom_call.1} parent=11 // pred_fallthru
        _
    $region12: #{tpu_custom_call.1} parent=5 // pred_fallthru
      _
    %p255 = scmp.lt.s32.totalorder %s14, 2
    // Predicated region
    $region29: #{tpu_custom_call.1} parent=5 // pred_check
      %p256 = pneg %p255
    $region30: #{tpu_custom_call.1} parent=5 // pred_check_branch
      %258 = sbr.rel (%p256) target = $region32
    $region31: #{tpu_custom_call.1} parent=5 // pred_region
      // Predicated region
      $region33: #{tpu_custom_call.1} parent=31 // pred_check
        %p259 = pneg %p34
      $region34: #{tpu_custom_call.1} parent=31 // pred_check_branch
        %261 = sbr.rel (%p259) target = $region36
      $region35: #{tpu_custom_call.1} parent=31 // pred_region
        %s262 = smul.u32 4, %s14
        %p263 = scmp.lt.s32.totalorder %s262, 7
        %s264 = scalar_select %p263, %s262, 7
        %s265 = smul.addr %s264, 8
        %s266 = scalar_lea.vmem %s0, %s265
        %s267 = smul.u32 4, %s14
      $region36: #{tpu_custom_call.1} parent=31 // pred_fallthru
        _
      // Predicated region
      $region37: #{tpu_custom_call.1} parent=31 // pred_check
        %p268 = pneg %p60
      $region38: #{tpu_custom_call.1} parent=31 // pred_check_branch
        %270 = sbr.rel (%p268) target = $region40
      $region39: #{tpu_custom_call.1} parent=31 // pred_region
        %s271 = smul.u32 4, %s14
        %p272 = scmp.lt.s32.totalorder %s271, 7
        %s273 = scalar_select %p272, %s271, 7
        %s274 = smul.addr %s273, 4
        %s275 = smul.addr %s274, 8
        %s276 = scalar_lea.vmem %s1, %s275
        %s277 = smul.u32 4, %s14
      $region40: #{tpu_custom_call.1} parent=31 // pred_fallthru
        _
      // Predicated region
      $region41: #{tpu_custom_call.1} parent=31 // pred_check
        %p278 = pneg %p86
      $region42: #{tpu_custom_call.1} parent=31 // pred_check_branch
        %280 = sbr.rel (%p278) target = $region44
      $region43: #{tpu_custom_call.1} parent=31 // pred_region
        %s281 = smul.u32 4, %s14
        %p282 = scmp.lt.s32.totalorder %s281, 7
        %s283 = scalar_select %p282, %s281, 7
        %s284 = smul.addr %s283, 4
        %s285 = smul.addr %s284, 8
        %s286 = scalar_lea.vmem %s2, %s285
        %s287 = smul.u32 4, %s14
      $region44: #{tpu_custom_call.1} parent=31 // pred_fallthru
        _
      // Predicated region
      $region45: #{tpu_custom_call.1} parent=31 // pred_check
        %p288 = pneg %p112
      $region46: #{tpu_custom_call.1} parent=31 // pred_check_branch
        %290 = sbr.rel (%p288) target = $region48
      $region47: #{tpu_custom_call.1} parent=31 // pred_region
        %s291 = smul.u32 4, %s14
        %p292 = scmp.lt.s32.totalorder %s291, 7
        %s293 = scalar_select %p292, %s291, 7
        %s294 = smul.addr %s293, 8
        %s295 = scalar_lea.vmem %s3, %s294
        %s296 = smul.u32 4, %s14
      $region48: #{tpu_custom_call.1} parent=31 // pred_fallthru
        _
    $region32: #{tpu_custom_call.1} parent=5 // pred_fallthru
      _
    %p297 = scmp.le.s32.totalorder 1, %s14
    %p298 = scmp.lt.s32.totalorder %s14, 3
    %p299 = pnand %p297, %p298
    %p300 = pneg %p299
    // Predicated region
    $region49: #{tpu_custom_call.1} parent=5 // pred_check
      _
    $region50: #{tpu_custom_call.1} parent=5 // pred_check_branch
      %302 = sbr.rel (%p299) target = $region52
    $region51: #{tpu_custom_call.1} parent=5 // pred_region
      %s303 = ssub.s32 %s14, 1
      %s304 = smul.u32 4, %s19
      %p305 = scmp.lt.s32.totalorder %s304, 7
      %s306 = scalar_select %p305, %s304, 7
      %s307 = smul.addr %s306, 8
      %s308 = scalar_lea.vmem %s0, %s307
      %p309 = pneg %p40
      %p310 = pneg %p37
      %s311 = smul.u32 4, %s19
      %p312 = scmp.lt.s32.totalorder %s311, 7
      %s313 = scalar_select %p312, %s311, 7
      %s314 = smul.addr %s313, 4
      %s315 = smul.addr %s314, 8
      %s316 = scalar_lea.vmem %s1, %s315
      %p317 = pneg %p66
      %p318 = pneg %p63
      %s319 = smul.u32 4, %s19
      %p320 = scmp.lt.s32.totalorder %s319, 7
      %s321 = scalar_select %p320, %s319, 7
      %s322 = smul.addr %s321, 4
      %s323 = smul.addr %s322, 8
      %s324 = scalar_lea.vmem %s2, %s323
      %p325 = pneg %p92
      %p326 = pneg %p89
      %s327 = smul.u32 4, %s19
      %p328 = scmp.lt.s32.totalorder %s327, 7
      %s329 = scalar_select %p328, %s327, 7
      %s330 = smul.addr %s329, 8
      %s331 = scalar_lea.vmem %s3, %s330
      %p332 = pneg %p118
      %p333 = pneg %p115
      %p334 = pneg %p139
      %p335 = pneg %p136
      %p336 = pneg %p160
      %p337 = pneg %p157
      %p338 = pneg %p181
      %p339 = pneg %p178
      %p340 = pneg %p202
      %p341 = pneg %p199
      %p342 = pneg %p228
      %p343 = pneg %p225
      %s344 = smul.u32 4, %s19
      %p345 = scmp.lt.s32.totalorder %s344, 7
      %s346 = scalar_select %p345, %s344, 7
      %s347 = smul.addr %s346, 8
      %s348 = scalar_lea.vmem %s8, %s347
      %s349 = smul.u32 4, %s19
      %p350 = scmp.lt.s32.totalorder %s349, 7
      %s351 = scalar_select %p350, %s349, 7
      %s352 = smul.addr %s351, 8
      %s353 = scalar_lea.vmem %s0, %s352
      %s354 = smul.u32 4, %s19
      %s355 = smul.u32 4, %s19
      %p356 = scmp.lt.s32.totalorder %s355, 7
      %s357 = scalar_select %p356, %s355, 7
      %s358 = smul.addr %s357, 4
      %s359 = smul.addr %s358, 8
      %s360 = scalar_lea.vmem %s1, %s359
      %s361 = smul.u32 4, %s19
      %s362 = smul.u32 4, %s19
      %p363 = scmp.lt.s32.totalorder %s362, 7
      %s364 = scalar_select %p363, %s362, 7
      %s365 = smul.addr %s364, 4
      %s366 = smul.addr %s365, 8
      %s367 = scalar_lea.vmem %s2, %s366
      %s368 = smul.u32 4, %s19
      %s369 = smul.u32 4, %s19
      %p370 = scmp.lt.s32.totalorder %s369, 7
      %s371 = scalar_select %p370, %s369, 7
      %s372 = smul.addr %s371, 8
      %s373 = scalar_lea.vmem %s3, %s372
      %s374 = smul.u32 4, %s19
      %s375 = smul.u32 4, %s19
      %p376 = scmp.lt.s32.totalorder %s375, 7
      %s377 = scalar_select %p376, %s375, 7
      %s378 = smul.addr %s377, 8
      %s379 = scalar_lea.vmem %s8, %s378
      %s380 = smul.u32 4, %s19
      %v381 = vld [vmem:[%s353] sm:$0xff]
      %v382 = vld [vmem:[%s353 + $0x8] sm:$0xff]
      %v383 = vld [vmem:[%s353 + $0x10] sm:$0xff]
      %v384 = vld [vmem:[%s353 + $0x18] sm:$0xff]
      %v385 = vld [vmem:[%s360] sm:$0xff]
      %v386 = vld [vmem:[%s360 + $0x8] sm:$0xff]
      %v387 = vld [vmem:[%s360 + $0x10] sm:$0xff]
      %v388 = vld [vmem:[%s360 + $0x18] sm:$0xff]
      %v389 = vld [vmem:[%s360 + $0x20] sm:$0xff]
      %v390 = vld [vmem:[%s360 + $0x28] sm:$0xff]
      %v391 = vld [vmem:[%s360 + $0x30] sm:$0xff]
      %v392 = vld [vmem:[%s360 + $0x38] sm:$0xff]
      %v393 = vld [vmem:[%s360 + $0x40] sm:$0xff]
      %v394 = vld [vmem:[%s360 + $0x48] sm:$0xff]
      %v395 = vld [vmem:[%s360 + $0x50] sm:$0xff]
      %v396 = vld [vmem:[%s360 + $0x58] sm:$0xff]
      %v397 = vld [vmem:[%s360 + $0x60] sm:$0xff]
      %v398 = vld [vmem:[%s360 + $0x68] sm:$0xff]
      %v399 = vld [vmem:[%s360 + $0x70] sm:$0xff]
      %v400 = vld [vmem:[%s360 + $0x78] sm:$0xff]
      %v401 = vld [vmem:[%s367] sm:$0xff]
      %v402 = vld [vmem:[%s367 + $0x8] sm:$0xff]
      %v403 = vld [vmem:[%s367 + $0x10] sm:$0xff]
      %v404 = vld [vmem:[%s367 + $0x18] sm:$0xff]
      %v405 = vld [vmem:[%s367 + $0x20] sm:$0xff]
      %v406 = vld [vmem:[%s367 + $0x28] sm:$0xff]
      %v407 = vld [vmem:[%s367 + $0x30] sm:$0xff]
      %v408 = vld [vmem:[%s367 + $0x38] sm:$0xff]
      %v409 = vld [vmem:[%s367 + $0x40] sm:$0xff]
      %v410 = vld [vmem:[%s367 + $0x48] sm:$0xff]
      %v411 = vld [vmem:[%s367 + $0x50] sm:$0xff]
      %v412 = vld [vmem:[%s367 + $0x58] sm:$0xff]
      %v413 = vld [vmem:[%s367 + $0x60] sm:$0xff]
      %v414 = vld [vmem:[%s367 + $0x68] sm:$0xff]
      %v415 = vld [vmem:[%s367 + $0x70] sm:$0xff]
      %v416 = vld [vmem:[%s367 + $0x78] sm:$0xff]
      %v417 = vld [vmem:[%s373] sm:$0xff]
      %v418 = vld [vmem:[%s373 + $0x8] sm:$0xff]
      %v419 = vld [vmem:[%s373 + $0x10] sm:$0xff]
      %v420 = vld [vmem:[%s373 + $0x18] sm:$0xff]
      %v421 = vld [vmem:[%s4] sm:$0xff]
      %v422 = vld [vmem:[%s4 + $0x8] sm:$0xff]
      %v423 = vld [vmem:[%s4 + $0x10] sm:$0xff]
      %v424 = vld [vmem:[%s4 + $0x18] sm:$0xff]
      %v425 = vld [vmem:[%s4 + $0x20] sm:$0xff]
      %v426 = vld [vmem:[%s4 + $0x28] sm:$0xff]
      %v427 = vld [vmem:[%s4 + $0x30] sm:$0xff]
      %v428 = vld [vmem:[%s4 + $0x38] sm:$0xff]
      %v429 = vld [vmem:[%s4 + $0x40] sm:$0xff]
      %v430 = vld [vmem:[%s4 + $0x48] sm:$0xff]
      %v431 = vld [vmem:[%s4 + $0x50] sm:$0xff]
      %v432 = vld [vmem:[%s4 + $0x58] sm:$0xff]
      %v433 = vld [vmem:[%s4 + $0x60] sm:$0xff]
      %v434 = vld [vmem:[%s4 + $0x68] sm:$0xff]
      %v435 = vld [vmem:[%s4 + $0x70] sm:$0xff]
      %v436 = vld [vmem:[%s4 + $0x78] sm:$0xff]
      %vm437 = vcmask 261120
      %v439 = vsel %vm437, %v381, 0
      %v442 = vsel %vm437, %v382, 0
      %v445 = vsel %vm437, %v383, 0
      %v448 = vsel %vm437, %v384, 0
      %450 = vmatprep.subr.mxu0 %v422
      %451 = vmatpush1.msra.mxu0 %v421
      %452 = vmatprep.subr.mxu0 %v426
      %453 = vmatpush1.msra.mxu0 %v425
      %454 = vmatprep.subr.mxu0 %v430
      %455 = vmatpush1.msra.mxu0 %v429
      %456 = vmatprep.subr.mxu0 %v434
      %457 = vmatpush1.msra.mxu0 %v433
      %458 = vmatprep.subr.mxu0 0.0
      %459 = vmatpush1.msra.mxu0 0.0
      %460 = vmatprep.subr.mxu0 0.0
      %461 = vmatpush1.msra.mxu0 0.0
      %462 = vmatprep.subr.mxu0 0.0
      %463 = vmatpush1.msra.mxu0 0.0
      %464 = vmatprep.subr.mxu0 0.0
      %465 = vmatpush1.msra.mxu0 0.0
      %466 = vmatprep.subr.mxu0 0.0
      %467 = vmatpush1.msra.mxu0 0.0
      %468 = vmatprep.subr.mxu0 0.0
      %469 = vmatpush1.msra.mxu0 0.0
      %470 = vmatprep.subr.mxu0 0.0
      %471 = vmatpush1.msra.mxu0 0.0
      %472 = vmatprep.subr.mxu0 0.0
      %473 = vmatpush1.msra.mxu0 0.0
      %474 = vmatprep.subr.mxu0 0.0
      %475 = vmatpush1.msra.mxu0 0.0
      %476 = vmatprep.subr.mxu0 0.0
      %477 = vmatpush1.msra.mxu0 0.0
      %478 = vmatprep.subr.mxu0 0.0
      %479 = vmatpush1.msra.mxu0 0.0
      %480 = vmatprep.subr.mxu0 0.0
      %481 = vmatpush1.msra.mxu0 0.0
      %482 = vmatprep.subr.mxu0 0.0
      %483 = vmatpush1.msra.mxu0 0.0
      %484 = vmatprep.subr.mxu0 0.0
      %485 = vmatpush1.msra.mxu0 0.0
      %486 = vmatprep.subr.mxu0 0.0
      %487 = vmatpush1.msra.mxu0 0.0
      %488 = vmatprep.subr.mxu0 0.0
      %489 = vmatpush1.msra.mxu0 0.0
      %490 = vmatprep.subr.mxu0 0.0
      %491 = vmatpush1.msra.mxu0 0.0
      %492 = vmatprep.subr.mxu0 0.0
      %493 = vmatpush1.msra.mxu0 0.0
      %494 = vmatprep.subr.mxu0 0.0
      %495 = vmatpush1.msra.mxu0 0.0
      %496 = vmatprep.subr.mxu0 0.0
      %497 = vmatpush1.msra.mxu0 0.0
      %498 = vmatprep.subr.mxu0 0.0
      %499 = vmatpush1.msra.mxu0 0.0
      %500 = vmatprep.subr.mxu0 0.0
      %501 = vmatpush1.msra.mxu0 0.0
      %502 = vmatprep.subr.mxu0 0.0
      %503 = vmatpush1.msra.mxu0 0.0
      %504 = vmatprep.subr.mxu0 0.0
      %505 = vmatpush1.msra.mxu0 0.0
      %506 = vmatprep.subr.mxu0 0.0
      %507 = vmatpush1.msra.mxu0 0.0
      %508 = vmatprep.subr.mxu0 0.0
      %509 = vmatpush1.msra.mxu0 0.0
      %510 = vmatprep.subr.mxu0 0.0
      %511 = vmatpush1.msra.mxu0 0.0
      %512 = vmatprep.subr.mxu0 0.0
      %513 = vmatpush1.msra.mxu0 0.0
      %514 = vmatprep.mubr.f32.mxu0 0.0
      %515 = vmatmul.mubr.f32.gmra.mrb[0].mxu0 %v439
      %v516 = vpop.f32.mrb[0].mxu0
      %v517 = vadd.f32 0.0, %v516
      %v518 = vpop.f32.mrb[0].mxu0
      %v519 = vadd.f32 0.0, %v518
      %520 = vmatprep.mubr.f32.mxu0 0.0
      %521 = vmatmul.mubr.f32.gmra.mrb[0].mxu0 %v442
      %v522 = vpop.f32.mrb[0].mxu0
      %v523 = vadd.f32 0.0, %v522
      %v524 = vpop.f32.mrb[0].mxu0
      %v525 = vadd.f32 0.0, %v524
      %526 = vmatprep.mubr.f32.mxu0 0.0
      %527 = vmatmul.mubr.f32.gmra.mrb[0].mxu0 %v445
      %v528 = vpop.f32.mrb[0].mxu0
      %v529 = vadd.f32 0.0, %v528
      %v530 = vpop.f32.mrb[0].mxu0
      %v531 = vadd.f32 0.0, %v530
      %532 = vmatprep.mubr.f32.mxu0 0.0
      %533 = vmatmul.mubr.f32.gmra.mrb[0].mxu0 %v448
      %v534 = vpop.f32.mrb[0].mxu0
      %v535 = vadd.f32 0.0, %v534
      %v536 = vpop.f32.mrb[0].mxu0
      %v537 = vadd.f32 0.0, %v536
      %538 = vdwg.mxu0
      %539 = vmatprep.subr.mxu0 %v424
      %540 = vmatpush1.msra.mxu0 %v423
      %541 = vmatprep.subr.mxu0 %v428
      %542 = vmatpush1.msra.mxu0 %v427
      %543 = vmatprep.subr.mxu0 %v432
      %544 = vmatpush1.msra.mxu0 %v431
      %545 = vmatprep.subr.mxu0 %v436
      %546 = vmatpush1.msra.mxu0 %v435
      %547 = vmatprep.subr.mxu0 0.0
      %548 = vmatpush1.msra.mxu0 0.0
      %549 = vmatprep.subr.mxu0 0.0
      %550 = vmatpush1.msra.mxu0 0.0
      %551 = vmatprep.subr.mxu0 0.0
      %552 = vmatpush1.msra.mxu0 0.0
      %553 = vmatprep.subr.mxu0 0.0
      %554 = vmatpush1.msra.mxu0 0.0
      %555 = vmatprep.subr.mxu0 0.0
      %556 = vmatpush1.msra.mxu0 0.0
      %557 = vmatprep.subr.mxu0 0.0
      %558 = vmatpush1.msra.mxu0 0.0
      %559 = vmatprep.subr.mxu0 0.0
      %560 = vmatpush1.msra.mxu0 0.0
      %561 = vmatprep.subr.mxu0 0.0
      %562 = vmatpush1.msra.mxu0 0.0
      %563 = vmatprep.subr.mxu0 0.0
      %564 = vmatpush1.msra.mxu0 0.0
      %565 = vmatprep.subr.mxu0 0.0
      %566 = vmatpush1.msra.mxu0 0.0
      %567 = vmatprep.subr.mxu0 0.0
      %568 = vmatpush1.msra.mxu0 0.0
      %569 = vmatprep.subr.mxu0 0.0
      %570 = vmatpush1.msra.mxu0 0.0
      %571 = vmatprep.subr.mxu0 0.0
      %572 = vmatpush1.msra.mxu0 0.0
      %573 = vmatprep.subr.mxu0 0.0
      %574 = vmatpush1.msra.mxu0 0.0
      %575 = vmatprep.subr.mxu0 0.0
      %576 = vmatpush1.msra.mxu0 0.0
      %577 = vmatprep.subr.mxu0 0.0
      %578 = vmatpush1.msra.mxu0 0.0
      %579 = vmatprep.subr.mxu0 0.0
      %580 = vmatpush1.msra.mxu0 0.0
      %581 = vmatprep.subr.mxu0 0.0
      %582 = vmatpush1.msra.mxu0 0.0
      %583 = vmatprep.subr.mxu0 0.0
      %584 = vmatpush1.msra.mxu0 0.0
      %585 = vmatprep.subr.mxu0 0.0
      %586 = vmatpush1.msra.mxu0 0.0
      %587 = vmatprep.subr.mxu0 0.0
      %588 = vmatpush1.msra.mxu0 0.0
      %589 = vmatprep.subr.mxu0 0.0
      %590 = vmatpush1.msra.mxu0 0.0
      %591 = vmatprep.subr.mxu0 0.0
      %592 = vmatpush1.msra.mxu0 0.0
      %593 = vmatprep.subr.mxu0 0.0
      %594 = vmatpush1.msra.mxu0 0.0
      %595 = vmatprep.subr.mxu0 0.0
      %596 = vmatpush1.msra.mxu0 0.0
      %597 = vmatprep.subr.mxu0 0.0
      %598 = vmatpush1.msra.mxu0 0.0
      %599 = vmatprep.subr.mxu0 0.0
      %600 = vmatpush1.msra.mxu0 0.0
      %601 = vmatprep.subr.mxu0 0.0
      %602 = vmatpush1.msra.mxu0 0.0
      %603 = vmatprep.mubr.f32.mxu0 0.0
      %604 = vmatmul.mubr.f32.gmra.mrb[0].mxu0 %v439
      %v605 = vpop.f32.mrb[0].mxu0
      %v606 = vadd.f32 0.0, %v605
      %v607 = vpop.f32.mrb[0].mxu0
      %v608 = vadd.f32 0.0, %v607
      %609 = vmatprep.mubr.f32.mxu0 0.0
      %610 = vmatmul.mubr.f32.gmra.mrb[0].mxu0 %v442
      %v611 = vpop.f32.mrb[0].mxu0
      %v612 = vadd.f32 0.0, %v611
      %v613 = vpop.f32.mrb[0].mxu0
      %v614 = vadd.f32 0.0, %v613
      %615 = vmatprep.mubr.f32.mxu0 0.0
      %616 = vmatmul.mubr.f32.gmra.mrb[0].mxu0 %v445
      %v617 = vpop.f32.mrb[0].mxu0
      %v618 = vadd.f32 0.0, %v617
      %v619 = vpop.f32.mrb[0].mxu0
      %v620 = vadd.f32 0.0, %v619
      %621 = vmatprep.mubr.f32.mxu0 0.0
      %622 = vmatmul.mubr.f32.gmra.mrb[0].mxu0 %v448
      %v623 = vpop.f32.mrb[0].mxu0
      %v624 = vadd.f32 0.0, %v623
      %v625 = vpop.f32.mrb[0].mxu0
      %v626 = vadd.f32 0.0, %v625
      %627 = vdwg.mxu0
      %v628 = vmul.f32 %v517, %v385
      %v629 = vmul.f32 %v519, %v386
      %v630 = vmul.f32 %v606, %v387
      %v631 = vmul.f32 %v608, %v388
      %v632 = vmul.f32 %v523, %v389
      %v633 = vmul.f32 %v525, %v390
      %v634 = vmul.f32 %v612, %v391
      %v635 = vmul.f32 %v614, %v392
      %v636 = vmul.f32 %v529, %v393
      %v637 = vmul.f32 %v531, %v394
      %v638 = vmul.f32 %v618, %v395
      %v639 = vmul.f32 %v620, %v396
      %v640 = vmul.f32 %v535, %v397
      %v641 = vmul.f32 %v537, %v398
      %v642 = vmul.f32 %v624, %v399
      %v643 = vmul.f32 %v626, %v400
      %v644 = vld [vmem:[%s5] sm:$0xff]
      %v645 = vld [vmem:[%s5 + $0x8] sm:$0xff]
      %v646 = vld [vmem:[%s5 + $0x10] sm:$0xff]
      %v647 = vld [vmem:[%s5 + $0x18] sm:$0xff]
      %v648 = vld [vmem:[%s5 + $0x20] sm:$0xff]
      %v649 = vld [vmem:[%s5 + $0x28] sm:$0xff]
      %v650 = vld [vmem:[%s5 + $0x30] sm:$0xff]
      %v651 = vld [vmem:[%s5 + $0x38] sm:$0xff]
      %v652 = vld [vmem:[%s5 + $0x40] sm:$0xff]
      %v653 = vld [vmem:[%s5 + $0x48] sm:$0xff]
      %v654 = vld [vmem:[%s5 + $0x50] sm:$0xff]
      %v655 = vld [vmem:[%s5 + $0x58] sm:$0xff]
      %v656 = vld [vmem:[%s5 + $0x60] sm:$0xff]
      %v657 = vld [vmem:[%s5 + $0x68] sm:$0xff]
      %v658 = vld [vmem:[%s5 + $0x70] sm:$0xff]
      %v659 = vld [vmem:[%s5 + $0x78] sm:$0xff]
      %v660 = vld [vmem:[%s5 + $0x80] sm:$0xff]
      %v661 = vld [vmem:[%s5 + $0x88] sm:$0xff]
      %v662 = vld [vmem:[%s5 + $0x90] sm:$0xff]
      %v663 = vld [vmem:[%s5 + $0x98] sm:$0xff]
      %v664 = vld [vmem:[%s5 + $0xa0] sm:$0xff]
      %v665 = vld [vmem:[%s5 + $0xa8] sm:$0xff]
      %v666 = vld [vmem:[%s5 + $0xb0] sm:$0xff]
      %v667 = vld [vmem:[%s5 + $0xb8] sm:$0xff]
      %v668 = vld [vmem:[%s5 + $0xc0] sm:$0xff]
      %v669 = vld [vmem:[%s5 + $0xc8] sm:$0xff]
      %v670 = vld [vmem:[%s5 + $0xd0] sm:$0xff]
      %v671 = vld [vmem:[%s5 + $0xd8] sm:$0xff]
      %v672 = vld [vmem:[%s5 + $0xe0] sm:$0xff]
      %v673 = vld [vmem:[%s5 + $0xe8] sm:$0xff]
      %v674 = vld [vmem:[%s5 + $0xf0] sm:$0xff]
      %v675 = vld [vmem:[%s5 + $0xf8] sm:$0xff]
      %v676 = vld [vmem:[%s5 + $0x100] sm:$0xff]
      %v677 = vld [vmem:[%s5 + $0x108] sm:$0xff]
      %v678 = vld [vmem:[%s5 + $0x110] sm:$0xff]
      %v679 = vld [vmem:[%s5 + $0x118] sm:$0xff]
      %v680 = vld [vmem:[%s5 + $0x120] sm:$0xff]
      %v681 = vld [vmem:[%s5 + $0x128] sm:$0xff]
      %v682 = vld [vmem:[%s5 + $0x130] sm:$0xff]
      %v683 = vld [vmem:[%s5 + $0x138] sm:$0xff]
      %v684 = vld [vmem:[%s5 + $0x140] sm:$0xff]
      %v685 = vld [vmem:[%s5 + $0x148] sm:$0xff]
      %v686 = vld [vmem:[%s5 + $0x150] sm:$0xff]
      %v687 = vld [vmem:[%s5 + $0x158] sm:$0xff]
      %v688 = vld [vmem:[%s5 + $0x160] sm:$0xff]
      %v689 = vld [vmem:[%s5 + $0x168] sm:$0xff]
      %v690 = vld [vmem:[%s5 + $0x170] sm:$0xff]
      %v691 = vld [vmem:[%s5 + $0x178] sm:$0xff]
      %v692 = vld [vmem:[%s5 + $0x180] sm:$0xff]
      %v693 = vld [vmem:[%s5 + $0x188] sm:$0xff]
      %v694 = vld [vmem:[%s5 + $0x190] sm:$0xff]
      %v695 = vld [vmem:[%s5 + $0x198] sm:$0xff]
      %v696 = vld [vmem:[%s5 + $0x1a0] sm:$0xff]
      %v697 = vld [vmem:[%s5 + $0x1a8] sm:$0xff]
      %v698 = vld [vmem:[%s5 + $0x1b0] sm:$0xff]
      %v699 = vld [vmem:[%s5 + $0x1b8] sm:$0xff]
      %v700 = vld [vmem:[%s5 + $0x1c0] sm:$0xff]
      %v701 = vld [vmem:[%s5 + $0x1c8] sm:$0xff]
      %v702 = vld [vmem:[%s5 + $0x1d0] sm:$0xff]
      %v703 = vld [vmem:[%s5 + $0x1d8] sm:$0xff]
      %v704 = vld [vmem:[%s5 + $0x1e0] sm:$0xff]
      %v705 = vld [vmem:[%s5 + $0x1e8] sm:$0xff]
      %v706 = vld [vmem:[%s5 + $0x1f0] sm:$0xff]
      %v707 = vld [vmem:[%s5 + $0x1f8] sm:$0xff]
      %v708 = vsub.f32 1.0, %v417
      %v709 = vsub.f32 1.0, %v418
      %v710 = vsub.f32 1.0, %v419
      %v711 = vsub.f32 1.0, %v420
      %v712 = vmul.f32 %v708, -1e+08
      %v713 = vmul.f32 %v709, -1e+08
      %v714 = vmul.f32 %v710, -1e+08
      %v715 = vmul.f32 %v711, -1e+08
      %716 = vmatprep.subr.mxu0 0.0
      %717 = vmatpush1.msra.mxu0 %v644
      %718 = vmatprep.subr.mxu0 0.0
      %719 = vmatpush1.msra.mxu0 %v645
      %720 = vmatprep.subr.mxu0 0.0
      %721 = vmatpush1.msra.mxu0 %v646
      %722 = vmatprep.subr.mxu0 0.0
      %723 = vmatpush1.msra.mxu0 %v647
      %724 = vmatprep.subr.mxu0 0.0
      %725 = vmatpush1.msra.mxu0 %v648
      %726 = vmatprep.subr.mxu0 0.0
      %727 = vmatpush1.msra.mxu0 %v649
      %728 = vmatprep.subr.mxu0 0.0
      %729 = vmatpush1.msra.mxu0 %v650
      %730 = vmatprep.subr.mxu0 0.0
      %731 = vmatpush1.msra.mxu0 %v651
      %732 = vmatprep.subr.mxu0 0.0
      %733 = vmatpush1.msra.mxu0 %v652
      %734 = vmatprep.subr.mxu0 0.0
      %735 = vmatpush1.msra.mxu0 %v653
      %736 = vmatprep.subr.mxu0 0.0
      %737 = vmatpush1.msra.mxu0 %v654
      %738 = vmatprep.subr.mxu0 0.0
      %739 = vmatpush1.msra.mxu0 %v655
      %740 = vmatprep.subr.mxu0 0.0
      %741 = vmatpush1.msra.mxu0 %v656
      %742 = vmatprep.subr.mxu0 0.0
      %743 = vmatpush1.msra.mxu0 %v657
      %744 = vmatprep.subr.mxu0 0.0
      %745 = vmatpush1.msra.mxu0 %v658
      %746 = vmatprep.subr.mxu0 0.0
      %747 = vmatpush1.msra.mxu0 %v659
      %748 = vmatprep.subr.mxu0 0.0
      %749 = vmatpush1.msra.mxu0 %v660
      %750 = vmatprep.subr.mxu0 0.0
      %751 = vmatpush1.msra.mxu0 %v661
      %752 = vmatprep.subr.mxu0 0.0
      %753 = vmatpush1.msra.mxu0 %v662
      %754 = vmatprep.subr.mxu0 0.0
      %755 = vmatpush1.msra.mxu0 %v663
      %756 = vmatprep.subr.mxu0 0.0
      %757 = vmatpush1.msra.mxu0 %v664
      %758 = vmatprep.subr.mxu0 0.0
      %759 = vmatpush1.msra.mxu0 %v665
      %760 = vmatprep.subr.mxu0 0.0
      %761 = vmatpush1.msra.mxu0 %v666
      %762 = vmatprep.subr.mxu0 0.0
      %763 = vmatpush1.msra.mxu0 %v667
      %764 = vmatprep.subr.mxu0 0.0
      %765 = vmatpush1.msra.mxu0 %v668
      %766 = vmatprep.subr.mxu0 0.0
      %767 = vmatpush1.msra.mxu0 %v669
      %768 = vmatprep.subr.mxu0 0.0
      %769 = vmatpush1.msra.mxu0 %v670
      %770 = vmatprep.subr.mxu0 0.0
      %771 = vmatpush1.msra.mxu0 %v671
      %772 = vmatprep.subr.mxu0 0.0
      %773 = vmatpush1.msra.mxu0 %v672
      %774 = vmatprep.subr.mxu0 0.0
      %775 = vmatpush1.msra.mxu0 %v673
      %776 = vmatprep.subr.mxu0 0.0
      %777 = vmatpush1.msra.mxu0 %v674
      %778 = vmatprep.subr.mxu0 0.0
      %779 = vmatpush1.msra.mxu0 %v675
      %780 = vmatprep.mubr.f32.mxu0 %v629
      %781 = vmatmul.mubr.f32.gmra.mrb[0].mxu0 %v628
      %v782 = vpop.f32.mrb[0].mxu0
      %v783 = vadd.f32 %v712, %v782
      %v784 = vpop.f32.mrb[0].mxu0
      %785 = vmatprep.mubr.f32.mxu0 %v633
      %786 = vmatmul.mubr.f32.gmra.mrb[0].mxu0 %v632
      %v787 = vpop.f32.mrb[0].mxu0
      %v788 = vadd.f32 %v713, %v787
      %v789 = vpop.f32.mrb[0].mxu0
      %790 = vmatprep.mubr.f32.mxu0 %v637
      %791 = vmatmul.mubr.f32.gmra.mrb[0].mxu0 %v636
      %v792 = vpop.f32.mrb[0].mxu0
      %v793 = vadd.f32 %v714, %v792
      %v794 = vpop.f32.mrb[0].mxu0
      %795 = vmatprep.mubr.f32.mxu0 %v641
      %796 = vmatmul.mubr.f32.gmra.mrb[0].mxu0 %v640
      %v797 = vpop.f32.mrb[0].mxu0
      %v798 = vadd.f32 %v715, %v797
      %v799 = vpop.f32.mrb[0].mxu0
      %800 = vdwg.mxu0
      %801 = vmatprep.subr.mxu0 0.0
      %802 = vmatpush1.msra.mxu0 %v676
      %803 = vmatprep.subr.mxu0 0.0
      %804 = vmatpush1.msra.mxu0 %v677
      %805 = vmatprep.subr.mxu0 0.0
      %806 = vmatpush1.msra.mxu0 %v678
      %807 = vmatprep.subr.mxu0 0.0
      %808 = vmatpush1.msra.mxu0 %v679
      %809 = vmatprep.subr.mxu0 0.0
      %810 = vmatpush1.msra.mxu0 %v680
      %811 = vmatprep.subr.mxu0 0.0
      %812 = vmatpush1.msra.mxu0 %v681
      %813 = vmatprep.subr.mxu0 0.0
      %814 = vmatpush1.msra.mxu0 %v682
      %815 = vmatprep.subr.mxu0 0.0
      %816 = vmatpush1.msra.mxu0 %v683
      %817 = vmatprep.subr.mxu0 0.0
      %818 = vmatpush1.msra.mxu0 %v684
      %819 = vmatprep.subr.mxu0 0.0
      %820 = vmatpush1.msra.mxu0 %v685
      %821 = vmatprep.subr.mxu0 0.0
      %822 = vmatpush1.msra.mxu0 %v686
      %823 = vmatprep.subr.mxu0 0.0
      %824 = vmatpush1.msra.mxu0 %v687
      %825 = vmatprep.subr.mxu0 0.0
      %826 = vmatpush1.msra.mxu0 %v688
      %827 = vmatprep.subr.mxu0 0.0
      %828 = vmatpush1.msra.mxu0 %v689
      %829 = vmatprep.subr.mxu0 0.0
      %830 = vmatpush1.msra.mxu0 %v690
      %831 = vmatprep.subr.mxu0 0.0
      %832 = vmatpush1.msra.mxu0 %v691
      %833 = vmatprep.subr.mxu0 0.0
      %834 = vmatpush1.msra.mxu0 %v692
      %835 = vmatprep.subr.mxu0 0.0
      %836 = vmatpush1.msra.mxu0 %v693
      %837 = vmatprep.subr.mxu0 0.0
      %838 = vmatpush1.msra.mxu0 %v694
      %839 = vmatprep.subr.mxu0 0.0
      %840 = vmatpush1.msra.mxu0 %v695
      %841 = vmatprep.subr.mxu0 0.0
      %842 = vmatpush1.msra.mxu0 %v696
      %843 = vmatprep.subr.mxu0 0.0
      %844 = vmatpush1.msra.mxu0 %v697
      %845 = vmatprep.subr.mxu0 0.0
      %846 = vmatpush1.msra.mxu0 %v698
      %847 = vmatprep.subr.mxu0 0.0
      %848 = vmatpush1.msra.mxu0 %v699
      %849 = vmatprep.subr.mxu0 0.0
      %850 = vmatpush1.msra.mxu0 %v700
      %851 = vmatprep.subr.mxu0 0.0
      %852 = vmatpush1.msra.mxu0 %v701
      %853 = vmatprep.subr.mxu0 0.0
      %854 = vmatpush1.msra.mxu0 %v702
      %855 = vmatprep.subr.mxu0 0.0
      %856 = vmatpush1.msra.mxu0 %v703
      %857 = vmatprep.subr.mxu0 0.0
      %858 = vmatpush1.msra.mxu0 %v704
      %859 = vmatprep.subr.mxu0 0.0
      %860 = vmatpush1.msra.mxu0 %v705
      %861 = vmatprep.subr.mxu0 0.0
      %862 = vmatpush1.msra.mxu0 %v706
      %863 = vmatprep.subr.mxu0 0.0
      %864 = vmatpush1.msra.mxu0 %v707
      %865 = vmatprep.mubr.f32.mxu0 %v631
      %866 = vmatmul.mubr.f32.gmra.mrb[0].mxu0 %v630
      %v867 = vpop.f32.mrb[0].mxu0
      %v868 = vadd.f32 %v783, %v867
      %v869 = vpop.f32.mrb[0].mxu0
      %870 = vmatprep.mubr.f32.mxu0 %v635
      %871 = vmatmul.mubr.f32.gmra.mrb[0].mxu0 %v634
      %v872 = vpop.f32.mrb[0].mxu0
      %v873 = vadd.f32 %v788, %v872
      %v874 = vpop.f32.mrb[0].mxu0
      %875 = vmatprep.mubr.f32.mxu0 %v639
      %876 = vmatmul.mubr.f32.gmra.mrb[0].mxu0 %v638
      %v877 = vpop.f32.mrb[0].mxu0
      %v878 = vadd.f32 %v793, %v877
      %v879 = vpop.f32.mrb[0].mxu0
      %880 = vmatprep.mubr.f32.mxu0 %v643
      %881 = vmatmul.mubr.f32.gmra.mrb[0].mxu0 %v642
      %v882 = vpop.f32.mrb[0].mxu0
      %v883 = vadd.f32 %v798, %v882
      %v884 = vpop.f32.mrb[0].mxu0
      %885 = vdwg.mxu0
      %vm886 = vcmask 130048
      %v887 = vsel %vm886, %v868, -inf
      %888 = vmax.xlane.f32.xlu0 %v887
      %v889 = vpop.xlane.xlu0 %888
      %v890 = vsel %vm886, %v873, -inf
      %891 = vmax.xlane.f32.xlu0 %v890
      %v892 = vpop.xlane.xlu0 %891
      %v893 = vsel %vm886, %v878, -inf
      %894 = vmax.xlane.f32.xlu0 %v893
      %v895 = vpop.xlane.xlu0 %894
      %v896 = vsel %vm886, %v883, -inf
      %897 = vmax.xlane.f32.xlu0 %v896
      %v898 = vpop.xlane.xlu0 %897
      %v899 = vsub.f32 %v868, %v889
      %v900 = vsub.f32 %v873, %v892
      %v901 = vsub.f32 %v878, %v895
      %v902 = vsub.f32 %v883, %v898
      %v903 = vmul.f32 %v899, 1.442695
      %v904 = vpow.pop %v903
      %v905 = vmul.f32 %v900, 1.442695
      %v906 = vpow.pop %v905
      %v907 = vmul.f32 %v901, 1.442695
      %v908 = vpow.pop %v907
      %v909 = vmul.f32 %v902, 1.442695
      %v910 = vpow.pop %v909
      %v911 = vsel %vm886, %v904, 0.0
      %912 = vadd.xlane.f32.xlu0 %v911
      %v913 = vpop.xlane.xlu0 %912
      %v914 = vsel %vm886, %v906, 0.0
      %915 = vadd.xlane.f32.xlu0 %v914
      %v916 = vpop.xlane.xlu0 %915
      %v917 = vsel %vm886, %v908, 0.0
      %918 = vadd.xlane.f32.xlu0 %v917
      %v919 = vpop.xlane.xlu0 %918
      %v920 = vsel %vm886, %v910, 0.0
      %921 = vadd.xlane.f32.xlu0 %v920
      %v922 = vpop.xlane.xlu0 %921
      %v923 = vrcp.pop %v913
      %v924 = vrcp.pop %v916
      %v925 = vrcp.pop %v919
      %v926 = vrcp.pop %v922
      %v927 = vmul.f32 %v904, %v923
      %v928 = vmul.f32 %v906, %v924
      %v929 = vmul.f32 %v908, %v925
      %v930 = vmul.f32 %v910, %v926
      %v931 = vld [vmem:[%s6] sm:$0xff]
      %v932 = vld [vmem:[%s6 + $0x8] sm:$0xff]
      %v933 = vld [vmem:[%s6 + $0x10] sm:$0xff]
      %v934 = vld [vmem:[%s6 + $0x18] sm:$0xff]
      %v935 = vld [vmem:[%s6 + $0x20] sm:$0xff]
      %v936 = vld [vmem:[%s6 + $0x28] sm:$0xff]
      %v937 = vld [vmem:[%s6 + $0x30] sm:$0xff]
      %v938 = vld [vmem:[%s6 + $0x38] sm:$0xff]
      %v940 = vsel %vm886, %v927, 0
      %v943 = vsel %vm886, %v928, 0
      %v946 = vsel %vm886, %v929, 0
      %v949 = vsel %vm886, %v930, 0
      %951 = vmatprep.subr.mxu0 %v932
      %952 = vmatpush1.msra.mxu0 %v931
      %953 = vmatprep.subr.mxu0 %v936
      %954 = vmatpush1.msra.mxu0 %v935
      %955 = vmatprep.subr.mxu0 0.0
      %956 = vmatpush1.msra.mxu0 0.0
      %957 = vmatprep.subr.mxu0 0.0
      %958 = vmatpush1.msra.mxu0 0.0
      %959 = vmatprep.subr.mxu0 0.0
      %960 = vmatpush1.msra.mxu0 0.0
      %961 = vmatprep.subr.mxu0 0.0
      %962 = vmatpush1.msra.mxu0 0.0
      %963 = vmatprep.subr.mxu0 0.0
      %964 = vmatpush1.msra.mxu0 0.0
      %965 = vmatprep.subr.mxu0 0.0
      %966 = vmatpush1.msra.mxu0 0.0
      %967 = vmatprep.subr.mxu0 0.0
      %968 = vmatpush1.msra.mxu0 0.0
      %969 = vmatprep.subr.mxu0 0.0
      %970 = vmatpush1.msra.mxu0 0.0
      %971 = vmatprep.subr.mxu0 0.0
      %972 = vmatpush1.msra.mxu0 0.0
      %973 = vmatprep.subr.mxu0 0.0
      %974 = vmatpush1.msra.mxu0 0.0
      %975 = vmatprep.subr.mxu0 0.0
      %976 = vmatpush1.msra.mxu0 0.0
      %977 = vmatprep.subr.mxu0 0.0
      %978 = vmatpush1.msra.mxu0 0.0
      %979 = vmatprep.subr.mxu0 0.0
      %980 = vmatpush1.msra.mxu0 0.0
      %981 = vmatprep.subr.mxu0 0.0
      %982 = vmatpush1.msra.mxu0 0.0
      %983 = vmatprep.subr.mxu0 0.0
      %984 = vmatpush1.msra.mxu0 0.0
      %985 = vmatprep.subr.mxu0 0.0
      %986 = vmatpush1.msra.mxu0 0.0
      %987 = vmatprep.subr.mxu0 0.0
      %988 = vmatpush1.msra.mxu0 0.0
      %989 = vmatprep.subr.mxu0 0.0
      %990 = vmatpush1.msra.mxu0 0.0
      %991 = vmatprep.subr.mxu0 0.0
      %992 = vmatpush1.msra.mxu0 0.0
      %993 = vmatprep.subr.mxu0 0.0
      %994 = vmatpush1.msra.mxu0 0.0
      %995 = vmatprep.subr.mxu0 0.0
      %996 = vmatpush1.msra.mxu0 0.0
      %997 = vmatprep.subr.mxu0 0.0
      %998 = vmatpush1.msra.mxu0 0.0
      %999 = vmatprep.subr.mxu0 0.0
      %1000 = vmatpush1.msra.mxu0 0.0
      %1001 = vmatprep.subr.mxu0 0.0
      %1002 = vmatpush1.msra.mxu0 0.0
      %1003 = vmatprep.subr.mxu0 0.0
      %1004 = vmatpush1.msra.mxu0 0.0
      %1005 = vmatprep.subr.mxu0 0.0
      %1006 = vmatpush1.msra.mxu0 0.0
      %1007 = vmatprep.subr.mxu0 0.0
      %1008 = vmatpush1.msra.mxu0 0.0
      %1009 = vmatprep.subr.mxu0 0.0
      %1010 = vmatpush1.msra.mxu0 0.0
      %1011 = vmatprep.subr.mxu0 0.0
      %1012 = vmatpush1.msra.mxu0 0.0
      %1013 = vmatprep.subr.mxu0 0.0
      %1014 = vmatpush1.msra.mxu0 0.0
      %1015 = vmatprep.mubr.f32.mxu0 0.0
      %1016 = vmatmul.mubr.f32.gmra.mrb[0].mxu0 %v940
      %v1017 = vpop.f32.mrb[0].mxu0
      %v1018 = vadd.f32 0.0, %v1017
      %v1019 = vpop.f32.mrb[0].mxu0
      %v1020 = vadd.f32 0.0, %v1019
      %1021 = vmatprep.mubr.f32.mxu0 0.0
      %1022 = vmatmul.mubr.f32.gmra.mrb[0].mxu0 %v943
      %v1023 = vpop.f32.mrb[0].mxu0
      %v1024 = vadd.f32 0.0, %v1023
      %v1025 = vpop.f32.mrb[0].mxu0
      %v1026 = vadd.f32 0.0, %v1025
      %1027 = vmatprep.mubr.f32.mxu0 0.0
      %1028 = vmatmul.mubr.f32.gmra.mrb[0].mxu0 %v946
      %v1029 = vpop.f32.mrb[0].mxu0
      %v1030 = vadd.f32 0.0, %v1029
      %v1031 = vpop.f32.mrb[0].mxu0
      %v1032 = vadd.f32 0.0, %v1031
      %1033 = vmatprep.mubr.f32.mxu0 0.0
      %1034 = vmatmul.mubr.f32.gmra.mrb[0].mxu0 %v949
      %v1035 = vpop.f32.mrb[0].mxu0
      %v1036 = vadd.f32 0.0, %v1035
      %v1037 = vpop.f32.mrb[0].mxu0
      %v1038 = vadd.f32 0.0, %v1037
      %1039 = vdwg.mxu0
      %1040 = vmatprep.subr.mxu0 %v934
      %1041 = vmatpush1.msra.mxu0 %v933
      %1042 = vmatprep.subr.mxu0 %v938
      %1043 = vmatpush1.msra.mxu0 %v937
      %1044 = vmatprep.subr.mxu0 0.0
      %1045 = vmatpush1.msra.mxu0 0.0
      %1046 = vmatprep.subr.mxu0 0.0
      %1047 = vmatpush1.msra.mxu0 0.0
      %1048 = vmatprep.subr.mxu0 0.0
      %1049 = vmatpush1.msra.mxu0 0.0
      %1050 = vmatprep.subr.mxu0 0.0
      %1051 = vmatpush1.msra.mxu0 0.0
      %1052 = vmatprep.subr.mxu0 0.0
      %1053 = vmatpush1.msra.mxu0 0.0
      %1054 = vmatprep.subr.mxu0 0.0
      %1055 = vmatpush1.msra.mxu0 0.0
      %1056 = vmatprep.subr.mxu0 0.0
      %1057 = vmatpush1.msra.mxu0 0.0
      %1058 = vmatprep.subr.mxu0 0.0
      %1059 = vmatpush1.msra.mxu0 0.0
      %1060 = vmatprep.subr.mxu0 0.0
      %1061 = vmatpush1.msra.mxu0 0.0
      %1062 = vmatprep.subr.mxu0 0.0
      %1063 = vmatpush1.msra.mxu0 0.0
      %1064 = vmatprep.subr.mxu0 0.0
      %1065 = vmatpush1.msra.mxu0 0.0
      %1066 = vmatprep.subr.mxu0 0.0
      %1067 = vmatpush1.msra.mxu0 0.0
      %1068 = vmatprep.subr.mxu0 0.0
      %1069 = vmatpush1.msra.mxu0 0.0
      %1070 = vmatprep.subr.mxu0 0.0
      %1071 = vmatpush1.msra.mxu0 0.0
      %1072 = vmatprep.subr.mxu0 0.0
      %1073 = vmatpush1.msra.mxu0 0.0
      %1074 = vmatprep.subr.mxu0 0.0
      %1075 = vmatpush1.msra.mxu0 0.0
      %1076 = vmatprep.subr.mxu0 0.0
      %1077 = vmatpush1.msra.mxu0 0.0
      %1078 = vmatprep.subr.mxu0 0.0
      %1079 = vmatpush1.msra.mxu0 0.0
      %1080 = vmatprep.subr.mxu0 0.0
      %1081 = vmatpush1.msra.mxu0 0.0
      %1082 = vmatprep.subr.mxu0 0.0
      %1083 = vmatpush1.msra.mxu0 0.0
      %1084 = vmatprep.subr.mxu0 0.0
      %1085 = vmatpush1.msra.mxu0 0.0
      %1086 = vmatprep.subr.mxu0 0.0
      %1087 = vmatpush1.msra.mxu0 0.0
      %1088 = vmatprep.subr.mxu0 0.0
      %1089 = vmatpush1.msra.mxu0 0.0
      %1090 = vmatprep.subr.mxu0 0.0
      %1091 = vmatpush1.msra.mxu0 0.0
      %1092 = vmatprep.subr.mxu0 0.0
      %1093 = vmatpush1.msra.mxu0 0.0
      %1094 = vmatprep.subr.mxu0 0.0
      %1095 = vmatpush1.msra.mxu0 0.0
      %1096 = vmatprep.subr.mxu0 0.0
      %1097 = vmatpush1.msra.mxu0 0.0
      %1098 = vmatprep.subr.mxu0 0.0
      %1099 = vmatpush1.msra.mxu0 0.0
      %1100 = vmatprep.subr.mxu0 0.0
      %1101 = vmatpush1.msra.mxu0 0.0
      %1102 = vmatprep.subr.mxu0 0.0
      %1103 = vmatpush1.msra.mxu0 0.0
      %1104 = vmatprep.mubr.f32.mxu0 0.0
      %1105 = vmatmul.mubr.f32.gmra.mrb[0].mxu0 %v940
      %v1106 = vpop.f32.mrb[0].mxu0
      %v1107 = vadd.f32 0.0, %v1106
      %v1108 = vpop.f32.mrb[0].mxu0
      %v1109 = vadd.f32 0.0, %v1108
      %1110 = vmatprep.mubr.f32.mxu0 0.0
      %1111 = vmatmul.mubr.f32.gmra.mrb[0].mxu0 %v943
      %v1112 = vpop.f32.mrb[0].mxu0
      %v1113 = vadd.f32 0.0, %v1112
      %v1114 = vpop.f32.mrb[0].mxu0
      %v1115 = vadd.f32 0.0, %v1114
      %1116 = vmatprep.mubr.f32.mxu0 0.0
      %1117 = vmatmul.mubr.f32.gmra.mrb[0].mxu0 %v946
      %v1118 = vpop.f32.mrb[0].mxu0
      %v1119 = vadd.f32 0.0, %v1118
      %v1120 = vpop.f32.mrb[0].mxu0
      %v1121 = vadd.f32 0.0, %v1120
      %1122 = vmatprep.mubr.f32.mxu0 0.0
      %1123 = vmatmul.mubr.f32.gmra.mrb[0].mxu0 %v949
      %v1124 = vpop.f32.mrb[0].mxu0
      %v1125 = vadd.f32 0.0, %v1124
      %v1126 = vpop.f32.mrb[0].mxu0
      %v1127 = vadd.f32 0.0, %v1126
      %1128 = vdwg.mxu0
      %v1129 = vmul.f32 %v1018, %v401
      %v1130 = vmul.f32 %v1020, %v402
      %v1131 = vmul.f32 %v1107, %v403
      %v1132 = vmul.f32 %v1109, %v404
      %v1133 = vmul.f32 %v1024, %v405
      %v1134 = vmul.f32 %v1026, %v406
      %v1135 = vmul.f32 %v1113, %v407
      %v1136 = vmul.f32 %v1115, %v408
      %v1137 = vmul.f32 %v1030, %v409
      %v1138 = vmul.f32 %v1032, %v410
      %v1139 = vmul.f32 %v1119, %v411
      %v1140 = vmul.f32 %v1121, %v412
      %v1141 = vmul.f32 %v1036, %v413
      %v1142 = vmul.f32 %v1038, %v414
      %v1143 = vmul.f32 %v1125, %v415
      %v1144 = vmul.f32 %v1127, %v416
      %v1145 = vld [vmem:[%s7] sm:$0xff]
      %v1146 = vld [vmem:[%s7 + $0x8] sm:$0xff]
      %v1147 = vld [vmem:[%s7 + $0x10] sm:$0xff]
      %v1148 = vld [vmem:[%s7 + $0x18] sm:$0xff]
      %v1149 = vld [vmem:[%s7 + $0x20] sm:$0xff]
      %v1150 = vld [vmem:[%s7 + $0x28] sm:$0xff]
      %v1151 = vld [vmem:[%s7 + $0x30] sm:$0xff]
      %v1152 = vld [vmem:[%s7 + $0x38] sm:$0xff]
      %v1153 = vld [vmem:[%s7 + $0x40] sm:$0xff]
      %v1154 = vld [vmem:[%s7 + $0x48] sm:$0xff]
      %v1155 = vld [vmem:[%s7 + $0x50] sm:$0xff]
      %v1156 = vld [vmem:[%s7 + $0x58] sm:$0xff]
      %v1157 = vld [vmem:[%s7 + $0x60] sm:$0xff]
      %v1158 = vld [vmem:[%s7 + $0x68] sm:$0xff]
      %v1159 = vld [vmem:[%s7 + $0x70] sm:$0xff]
      %v1160 = vld [vmem:[%s7 + $0x78] sm:$0xff]
      %v1161 = vld [vmem:[%s7 + $0x80] sm:$0xff]
      %v1162 = vld [vmem:[%s7 + $0x88] sm:$0xff]
      %v1163 = vld [vmem:[%s7 + $0x90] sm:$0xff]
      %v1164 = vld [vmem:[%s7 + $0x98] sm:$0xff]
      %v1165 = vld [vmem:[%s7 + $0xa0] sm:$0xff]
      %v1166 = vld [vmem:[%s7 + $0xa8] sm:$0xff]
      %v1167 = vld [vmem:[%s7 + $0xb0] sm:$0xff]
      %v1168 = vld [vmem:[%s7 + $0xb8] sm:$0xff]
      %v1169 = vld [vmem:[%s7 + $0xc0] sm:$0xff]
      %v1170 = vld [vmem:[%s7 + $0xc8] sm:$0xff]
      %v1171 = vld [vmem:[%s7 + $0xd0] sm:$0xff]
      %v1172 = vld [vmem:[%s7 + $0xd8] sm:$0xff]
      %v1173 = vld [vmem:[%s7 + $0xe0] sm:$0xff]
      %v1174 = vld [vmem:[%s7 + $0xe8] sm:$0xff]
      %v1175 = vld [vmem:[%s7 + $0xf0] sm:$0xff]
      %v1176 = vld [vmem:[%s7 + $0xf8] sm:$0xff]
      %v1177 = vld [vmem:[%s7 + $0x100] sm:$0xff]
      %v1178 = vld [vmem:[%s7 + $0x108] sm:$0xff]
      %v1179 = vld [vmem:[%s7 + $0x110] sm:$0xff]
      %v1180 = vld [vmem:[%s7 + $0x118] sm:$0xff]
      %v1181 = vld [vmem:[%s7 + $0x120] sm:$0xff]
      %v1182 = vld [vmem:[%s7 + $0x128] sm:$0xff]
      %v1183 = vld [vmem:[%s7 + $0x130] sm:$0xff]
      %v1184 = vld [vmem:[%s7 + $0x138] sm:$0xff]
      %v1185 = vld [vmem:[%s7 + $0x140] sm:$0xff]
      %v1186 = vld [vmem:[%s7 + $0x148] sm:$0xff]
      %v1187 = vld [vmem:[%s7 + $0x150] sm:$0xff]
      %v1188 = vld [vmem:[%s7 + $0x158] sm:$0xff]
      %v1189 = vld [vmem:[%s7 + $0x160] sm:$0xff]
      %v1190 = vld [vmem:[%s7 + $0x168] sm:$0xff]
      %v1191 = vld [vmem:[%s7 + $0x170] sm:$0xff]
      %v1192 = vld [vmem:[%s7 + $0x178] sm:$0xff]
      %v1193 = vld [vmem:[%s7 + $0x180] sm:$0xff]
      %v1194 = vld [vmem:[%s7 + $0x188] sm:$0xff]
      %v1195 = vld [vmem:[%s7 + $0x190] sm:$0xff]
      %v1196 = vld [vmem:[%s7 + $0x198] sm:$0xff]
      %v1197 = vld [vmem:[%s7 + $0x1a0] sm:$0xff]
      %v1198 = vld [vmem:[%s7 + $0x1a8] sm:$0xff]
      %v1199 = vld [vmem:[%s7 + $0x1b0] sm:$0xff]
      %v1200 = vld [vmem:[%s7 + $0x1b8] sm:$0xff]
      %v1201 = vld [vmem:[%s7 + $0x1c0] sm:$0xff]
      %v1202 = vld [vmem:[%s7 + $0x1c8] sm:$0xff]
      %v1203 = vld [vmem:[%s7 + $0x1d0] sm:$0xff]
      %v1204 = vld [vmem:[%s7 + $0x1d8] sm:$0xff]
      %v1205 = vld [vmem:[%s7 + $0x1e0] sm:$0xff]
      %v1206 = vld [vmem:[%s7 + $0x1e8] sm:$0xff]
      %v1207 = vld [vmem:[%s7 + $0x1f0] sm:$0xff]
      %v1208 = vld [vmem:[%s7 + $0x1f8] sm:$0xff]
      %1209 = vmatprep.subr.mxu0 0.0
      %1210 = vmatpush1.msra.mxu0 %v1145
      %1211 = vmatprep.subr.mxu0 0.0
      %1212 = vmatpush1.msra.mxu0 %v1146
      %1213 = vmatprep.subr.mxu0 0.0
      %1214 = vmatpush1.msra.mxu0 %v1147
      %1215 = vmatprep.subr.mxu0 0.0
      %1216 = vmatpush1.msra.mxu0 %v1148
      %1217 = vmatprep.subr.mxu0 0.0
      %1218 = vmatpush1.msra.mxu0 %v1149
      %1219 = vmatprep.subr.mxu0 0.0
      %1220 = vmatpush1.msra.mxu0 %v1150
      %1221 = vmatprep.subr.mxu0 0.0
      %1222 = vmatpush1.msra.mxu0 %v1151
      %1223 = vmatprep.subr.mxu0 0.0
      %1224 = vmatpush1.msra.mxu0 %v1152
      %1225 = vmatprep.subr.mxu0 0.0
      %1226 = vmatpush1.msra.mxu0 %v1153
      %1227 = vmatprep.subr.mxu0 0.0
      %1228 = vmatpush1.msra.mxu0 %v1154
      %1229 = vmatprep.subr.mxu0 0.0
      %1230 = vmatpush1.msra.mxu0 %v1155
      %1231 = vmatprep.subr.mxu0 0.0
      %1232 = vmatpush1.msra.mxu0 %v1156
      %1233 = vmatprep.subr.mxu0 0.0
      %1234 = vmatpush1.msra.mxu0 %v1157
      %1235 = vmatprep.subr.mxu0 0.0
      %1236 = vmatpush1.msra.mxu0 %v1158
      %1237 = vmatprep.subr.mxu0 0.0
      %1238 = vmatpush1.msra.mxu0 %v1159
      %1239 = vmatprep.subr.mxu0 0.0
      %1240 = vmatpush1.msra.mxu0 %v1160
      %1241 = vmatprep.subr.mxu0 0.0
      %1242 = vmatpush1.msra.mxu0 %v1161
      %1243 = vmatprep.subr.mxu0 0.0
      %1244 = vmatpush1.msra.mxu0 %v1162
      %1245 = vmatprep.subr.mxu0 0.0
      %1246 = vmatpush1.msra.mxu0 %v1163
      %1247 = vmatprep.subr.mxu0 0.0
      %1248 = vmatpush1.msra.mxu0 %v1164
      %1249 = vmatprep.subr.mxu0 0.0
      %1250 = vmatpush1.msra.mxu0 %v1165
      %1251 = vmatprep.subr.mxu0 0.0
      %1252 = vmatpush1.msra.mxu0 %v1166
      %1253 = vmatprep.subr.mxu0 0.0
      %1254 = vmatpush1.msra.mxu0 %v1167
      %1255 = vmatprep.subr.mxu0 0.0
      %1256 = vmatpush1.msra.mxu0 %v1168
      %1257 = vmatprep.subr.mxu0 0.0
      %1258 = vmatpush1.msra.mxu0 %v1169
      %1259 = vmatprep.subr.mxu0 0.0
      %1260 = vmatpush1.msra.mxu0 %v1170
      %1261 = vmatprep.subr.mxu0 0.0
      %1262 = vmatpush1.msra.mxu0 %v1171
      %1263 = vmatprep.subr.mxu0 0.0
      %1264 = vmatpush1.msra.mxu0 %v1172
      %1265 = vmatprep.subr.mxu0 0.0
      %1266 = vmatpush1.msra.mxu0 %v1173
      %1267 = vmatprep.subr.mxu0 0.0
      %1268 = vmatpush1.msra.mxu0 %v1174
      %1269 = vmatprep.subr.mxu0 0.0
      %1270 = vmatpush1.msra.mxu0 %v1175
      %1271 = vmatprep.subr.mxu0 0.0
      %1272 = vmatpush1.msra.mxu0 %v1176
      %1273 = vmatprep.mubr.f32.mxu0 %v1130
      %1274 = vmatmul.mubr.f32.gmra.mrb[0].mxu0 %v1129
      %v1275 = vpop.f32.mrb[0].mxu0
      %v1276 = vadd.f32 0.0, %v1275
      %v1277 = vpop.f32.mrb[0].mxu0
      %1278 = vmatprep.mubr.f32.mxu0 %v1134
      %1279 = vmatmul.mubr.f32.gmra.mrb[0].mxu0 %v1133
      %v1280 = vpop.f32.mrb[0].mxu0
      %v1281 = vadd.f32 0.0, %v1280
      %v1282 = vpop.f32.mrb[0].mxu0
      %1283 = vmatprep.mubr.f32.mxu0 %v1138
      %1284 = vmatmul.mubr.f32.gmra.mrb[0].mxu0 %v1137
      %v1285 = vpop.f32.mrb[0].mxu0
      %v1286 = vadd.f32 0.0, %v1285
      %v1287 = vpop.f32.mrb[0].mxu0
      %1288 = vmatprep.mubr.f32.mxu0 %v1142
      %1289 = vmatmul.mubr.f32.gmra.mrb[0].mxu0 %v1141
      %v1290 = vpop.f32.mrb[0].mxu0
      %v1291 = vadd.f32 0.0, %v1290
      %v1292 = vpop.f32.mrb[0].mxu0
      %1293 = vdwg.mxu0
      %1294 = vmatprep.subr.mxu0 0.0
      %1295 = vmatpush1.msra.mxu0 %v1177
      %1296 = vmatprep.subr.mxu0 0.0
      %1297 = vmatpush1.msra.mxu0 %v1178
      %1298 = vmatprep.subr.mxu0 0.0
      %1299 = vmatpush1.msra.mxu0 %v1179
      %1300 = vmatprep.subr.mxu0 0.0
      %1301 = vmatpush1.msra.mxu0 %v1180
      %1302 = vmatprep.subr.mxu0 0.0
      %1303 = vmatpush1.msra.mxu0 %v1181
      %1304 = vmatprep.subr.mxu0 0.0
      %1305 = vmatpush1.msra.mxu0 %v1182
      %1306 = vmatprep.subr.mxu0 0.0
      %1307 = vmatpush1.msra.mxu0 %v1183
      %1308 = vmatprep.subr.mxu0 0.0
      %1309 = vmatpush1.msra.mxu0 %v1184
      %1310 = vmatprep.subr.mxu0 0.0
      %1311 = vmatpush1.msra.mxu0 %v1185
      %1312 = vmatprep.subr.mxu0 0.0
      %1313 = vmatpush1.msra.mxu0 %v1186
      %1314 = vmatprep.subr.mxu0 0.0
      %1315 = vmatpush1.msra.mxu0 %v1187
      %1316 = vmatprep.subr.mxu0 0.0
      %1317 = vmatpush1.msra.mxu0 %v1188
      %1318 = vmatprep.subr.mxu0 0.0
      %1319 = vmatpush1.msra.mxu0 %v1189
      %1320 = vmatprep.subr.mxu0 0.0
      %1321 = vmatpush1.msra.mxu0 %v1190
      %1322 = vmatprep.subr.mxu0 0.0
      %1323 = vmatpush1.msra.mxu0 %v1191
      %1324 = vmatprep.subr.mxu0 0.0
      %1325 = vmatpush1.msra.mxu0 %v1192
      %1326 = vmatprep.subr.mxu0 0.0
      %1327 = vmatpush1.msra.mxu0 %v1193
      %1328 = vmatprep.subr.mxu0 0.0
      %1329 = vmatpush1.msra.mxu0 %v1194
      %1330 = vmatprep.subr.mxu0 0.0
      %1331 = vmatpush1.msra.mxu0 %v1195
      %1332 = vmatprep.subr.mxu0 0.0
      %1333 = vmatpush1.msra.mxu0 %v1196
      %1334 = vmatprep.subr.mxu0 0.0
      %1335 = vmatpush1.msra.mxu0 %v1197
      %1336 = vmatprep.subr.mxu0 0.0
      %1337 = vmatpush1.msra.mxu0 %v1198
      %1338 = vmatprep.subr.mxu0 0.0
      %1339 = vmatpush1.msra.mxu0 %v1199
      %1340 = vmatprep.subr.mxu0 0.0
      %1341 = vmatpush1.msra.mxu0 %v1200
      %1342 = vmatprep.subr.mxu0 0.0
      %1343 = vmatpush1.msra.mxu0 %v1201
      %1344 = vmatprep.subr.mxu0 0.0
      %1345 = vmatpush1.msra.mxu0 %v1202
      %1346 = vmatprep.subr.mxu0 0.0
      %1347 = vmatpush1.msra.mxu0 %v1203
      %1348 = vmatprep.subr.mxu0 0.0
      %1349 = vmatpush1.msra.mxu0 %v1204
      %1350 = vmatprep.subr.mxu0 0.0
      %1351 = vmatpush1.msra.mxu0 %v1205
      %1352 = vmatprep.subr.mxu0 0.0
      %1353 = vmatpush1.msra.mxu0 %v1206
      %1354 = vmatprep.subr.mxu0 0.0
      %1355 = vmatpush1.msra.mxu0 %v1207
      %1356 = vmatprep.subr.mxu0 0.0
      %1357 = vmatpush1.msra.mxu0 %v1208
      %1358 = vmatprep.mubr.f32.mxu0 %v1132
      %1359 = vmatmul.mubr.f32.gmra.mrb[0].mxu0 %v1131
      %v1360 = vpop.f32.mrb[0].mxu0
      %v1361 = vadd.f32 %v1276, %v1360
      %v1362 = vpop.f32.mrb[0].mxu0
      %1363 = vmatprep.mubr.f32.mxu0 %v1136
      %1364 = vmatmul.mubr.f32.gmra.mrb[0].mxu0 %v1135
      %v1365 = vpop.f32.mrb[0].mxu0
      %v1366 = vadd.f32 %v1281, %v1365
      %v1367 = vpop.f32.mrb[0].mxu0
      %1368 = vmatprep.mubr.f32.mxu0 %v1140
      %1369 = vmatmul.mubr.f32.gmra.mrb[0].mxu0 %v1139
      %v1370 = vpop.f32.mrb[0].mxu0
      %v1371 = vadd.f32 %v1286, %v1370
      %v1372 = vpop.f32.mrb[0].mxu0
      %1373 = vmatprep.mubr.f32.mxu0 %v1144
      %1374 = vmatmul.mubr.f32.gmra.mrb[0].mxu0 %v1143
      %v1375 = vpop.f32.mrb[0].mxu0
      %v1376 = vadd.f32 %v1291, %v1375
      %v1377 = vpop.f32.mrb[0].mxu0
      %1378 = vdwg.mxu0
      %1379 = vst.msk [vmem:[%s379] sm:$0xff] %vm437, %v1361
      %1380 = vst.msk [vmem:[%s379 + $0x8] sm:$0xff] %vm437, %v1366
      %1381 = vst.msk [vmem:[%s379 + $0x10] sm:$0xff] %vm437, %v1371
      %1382 = vst.msk [vmem:[%s379 + $0x18] sm:$0xff] %vm437, %v1376
      %s1383 = smul.u32 4, %s19
      %p1384 = scmp.lt.s32.totalorder %s1383, 7
      %s1385 = scalar_select %p1384, %s1383, 7
      %s1386 = smul.addr %s1385, 8
      %s1387 = scalar_lea.vmem %s8, %s1386
      // Predicated region
      $region53: #{tpu_custom_call.1} parent=51 // pred_check
        %p1388 = pneg %p225
      $region54: #{tpu_custom_call.1} parent=51 // pred_check_branch
        %1390 = sbr.rel (%p1388) target = $region56
      $region55: #{tpu_custom_call.1} parent=51 // pred_region
        %s1391 = smul.u32 4, %s19
      $region56: #{tpu_custom_call.1} parent=51 // pred_fallthru
        _
    $region52: #{tpu_custom_call.1} parent=5 // pred_fallthru
      _
    %p1392 = scmp.le.s32.totalorder 2, %s14
    // Predicated region
    $region57: #{tpu_custom_call.1} parent=5 // pred_check
      %p1393 = pneg %p1392
    $region58: #{tpu_custom_call.1} parent=5 // pred_check_branch
      %1395 = sbr.rel (%p1393) target = $region60
    $region59: #{tpu_custom_call.1} parent=5 // pred_region
      %s1396 = ssub.s32 %s14, 2
      // Predicated region
      $region61: #{tpu_custom_call.1} parent=59 // pred_check
        %p1397 = pneg %p231
      $region62: #{tpu_custom_call.1} parent=59 // pred_check_branch
        %1399 = sbr.rel (%p1397) target = $region64
      $region63: #{tpu_custom_call.1} parent=59 // pred_region
        %s1400 = smul.u32 4, %s20
        %p1401 = scmp.lt.s32.totalorder %s1400, 7
        %s1402 = scalar_select %p1401, %s1400, 7
        %s1403 = smul.addr %s1402, 8
        %s1404 = scalar_lea.vmem %s8, %s1403
      $region64: #{tpu_custom_call.1} parent=59 // pred_fallthru
        _
    $region60: #{tpu_custom_call.1} parent=5 // pred_fallthru
      _
  $region6: #{tpu_custom_call.1} parent=0 // loop_footer
    %s18 = sadd.s32 1, %s14
  $region7: #{tpu_custom_call.1} parent=0 // loop_footer_branch
    %13 = sbr.rel target = $region3
  $region8: #{tpu_custom_call.1} parent=0 // loop_exit
    _

</llo_original>
